<compile_context>
chip_gen: v7x
topology: tpu7x:2x2x1
jax: 0.10.0
libtpu: 0.0.40
codegen_flags: <defaults>
</compile_context>

<pallas_src>
import functools

import jax
import jax.numpy as jnp
from jax import lax
from jax.experimental import pallas as pl
from jax.experimental.pallas import tpu as pltpu


def _gat_net_kernel(x_ref, w_ref, a_src_ref, a_dst_ref, bias_ref, hmask_ref,
                    hsum_ref, o_ref, *, num_heads):
    """One grid step == one GAT layer.  o_ref is the resident (N, DP) carry."""
    layer = pl.program_id(0)

    @pl.when(layer == 0)
    def _init():
        o_ref[...] = x_ref[...]          # seed the carry with the padded input

    x = o_ref[...]                       # (N, DP) f32; columns >= D are zero
    bias = bias_ref[...]                 # (N, N) f32 additive mask bias

    # Fused multi-head projection: one lane-dense (N, H*D) MXU pass.
    # Padded rows of w are zero, so the DP-wide contraction is exact (and costs
    # the same MXU cycles as a D-wide one).
    z_all = jnp.dot(x, w_ref[...], preferred_element_type=jnp.float32)

    # Attention logit halves via block-diagonal selector matmuls (f32; O(N)
    # work, keeps the logits exact).  s_src already lands in (H, N) row
    # orientation so no transpose is needed when broadcasting over dst rows.
    s_src_rows = lax.dot_general(
        a_src_ref[...], z_all, (((1,), (1,)), ((), ())),
        preferred_element_type=jnp.float32)                          # (H, N)
    s_dst = lax.dot_general(
        z_all, a_dst_ref[...], (((1,), (1,)), ((), ())),
        preferred_element_type=jnp.float32)                          # (N, H)

    # Lane-dense aggregation slab: head h fills columns [h*D, (h+1)*D).
    agg = jnp.zeros_like(z_all)                                      # (N, HD)
    for h in range(num_heads):           # static unroll, H is small
        # edge_attention: e[v, u] = leaky_relu(a . [z_u, z_v]); mask via bias.
        e = s_dst[:, h:h + 1] + s_src_rows[h:h + 1, :]               # (N, N)
        e = jnp.maximum(e, 0.01 * e) + bias                          # leaky + mask

        # reduce_func: softmax over in-neighbors.  Non-edges carry -1e9 so
        # exp underflows to exactly 0 -- no select needed.
        e_max = jnp.max(e, axis=1, keepdims=True)
        p = jnp.exp(e - e_max)                                       # (N, N)
        inv = pl.reciprocal(
            jnp.maximum(jnp.sum(p, axis=1, keepdims=True), 1e-30), approx=True)

        # Head-masked z so the bf16 aggregation matmul writes its result
        # straight into the dense slab's head-h columns (extra zero columns are
        # free: output width <= 256 MXU columns).
        z_h = (z_all * hmask_ref[h:h + 1, :]).astype(jnp.bfloat16)   # (N, HD)
        agg = agg + jnp.dot(p.astype(jnp.bfloat16), z_h,
                            preferred_element_type=jnp.float32) * inv

    # activation = F.elu, once, on the full 128-lane slab.
    elu = jnp.where(agg > 0, agg, jnp.exp(jnp.minimum(agg, 0.0)) - 1.0)

    # mean over heads (x 1/H) and the 0.5 residual weight are folded into the
    # host-packed head-sum matrix; the head reduction runs on the MXU.  Then
    # residual (alpha=0.5, Identity res_fc) and the per-layer nn.LeakyReLU.
    # Padded columns stay exactly zero, so the carry remains consistent.
    m = jnp.dot(elu, hsum_ref[...], preferred_element_type=jnp.float32) + 0.5 * x
    o_ref[...] = jnp.maximum(m, 0.01 * m)                            # (N, DP)


def gat_net_pallas(x, params, adj, num_heads):
    """Whole GATNet forward in a single pallas_call.

    x:      (N, D) float32 node features.
    params: list of (w_heads, a_heads) per layer,
            w_heads (H, D, D)  with z = x @ w_heads[h],
            a_heads (H, 2, D)  with row 0 = a_src, row 1 = a_dst.
    adj:    (N, N) {0,1} adjacency mask, adj[dst, src].
    """
    N, D = x.shape
    num_layers = len(params)
    HD = num_heads * D
    DP = ((D + 127) // 128) * 128       # lane-dense carry width (>= 128)

    # ---- host-side packing (layout plumbing, done once at trace time) ----
    eye = jnp.eye(num_heads, dtype=jnp.float32)
    w_l, src_l, dst_l = [], [], []
    for w_heads, a_heads in params:
        # (H, D, D) -> (DP, H*D): column block h holds head h's fc weight,
        # rows D..DP-1 are zero padding.
        w_flat = jnp.transpose(w_heads, (1, 0, 2)).reshape(D, HD)
        w_l.append(jnp.zeros((DP, HD), jnp.float32).at[:D, :].set(w_flat))
        # Block-diagonal selectors (H, H*D): row h is a_src_h / a_dst_h in head
        # h's D-lane slice, zeros elsewhere.
        src_l.append((eye[:, :, None] * a_heads[:, None, 0, :]).reshape(num_heads, HD))
        dst_l.append((eye[:, :, None] * a_heads[:, None, 1, :]).reshape(num_heads, HD))
    w_stack = jnp.stack(w_l)                              # (L, DP, HD)
    a_src = jnp.stack(src_l).astype(jnp.float32)          # (L, H, HD)
    a_dst = jnp.stack(dst_l).astype(jnp.float32)          # (L, H, HD)

    # Additive attention bias: 0 on edges, -1e9 elsewhere (f32; see TODO about
    # shipping it bf16 on v6e/v7x at realistic N).
    bias = jnp.where(adj > 0, 0.0, -1e9).astype(jnp.float32)          # (N, N)

    # Head one-hot blocks (H, HD): row h is 1 on head h's D lanes.
    head_mask = jnp.kron(eye, jnp.ones((1, D), jnp.float32))          # (H, HD)

    # Head-sum matrix (HD, DP): stacked identities scaled by 0.5/H (mean over
    # heads + residual weight), zero-padded to DP output columns.
    hsum = jnp.kron(jnp.ones((num_heads, 1), jnp.float32),
                    jnp.eye(D, dtype=jnp.float32)) * (0.5 / num_heads)  # (HD, D)
    hsum = jnp.zeros((HD, DP), jnp.float32).at[:, :D].set(hsum)

    # Lane-dense padded input / carry.
    x_pad = jnp.zeros((N, DP), jnp.float32).at[:, :D].set(x)

    kernel = functools.partial(_gat_net_kernel, num_heads=num_heads)
    out_pad = pl.pallas_call(
        kernel,
        out_shape=jax.ShapeDtypeStruct((N, DP), jnp.float32),
        grid_spec=pltpu.PrefetchScalarGridSpec(
            num_scalar_prefetch=0,
            grid=(num_layers,),
            in_specs=[
                pl.BlockSpec((N, DP), lambda l: (0, 0)),                    # padded x
                pl.BlockSpec((None, DP, HD), lambda l: (l, 0, 0)),          # stacked fc W
                pl.BlockSpec((None, num_heads, HD), lambda l: (l, 0, 0)),   # src selectors
                pl.BlockSpec((None, num_heads, HD), lambda l: (l, 0, 0)),   # dst selectors
                pl.BlockSpec((N, N), lambda l: (0, 0)),                     # additive bias
                pl.BlockSpec((num_heads, HD), lambda l: (0, 0)),            # head masks
                pl.BlockSpec((HD, DP), lambda l: (0, 0)),                   # head-sum matrix
            ],
            out_specs=pl.BlockSpec((N, DP), lambda l: (0, 0)),  # resident feature carry
        ),
        compiler_params=pltpu.CompilerParams(
            dimension_semantics=("arbitrary",),    # layer axis is a sequential carry
            # TODO(synk): re-derive when scaling N (resident (N,N) bias + temps
            # exceed the default scoped budget beyond ~4k nodes); keep < 64 MiB
            # headroom on v7x.
            vmem_limit_bytes=32 * 1024 * 1024),
    )(x_pad, w_stack, a_src, a_dst, bias, head_mask, hsum)
    return out_pad[:, :D]


def gat_net_ref(x, params, adj, num_heads):
    """Pure-JAX reference (faithful to the PyTorch module, eval mode)."""
    mask = adj > 0.0
    for w_heads, a_heads in params:
        outs = []
        for h in range(num_heads):
            z = x @ w_heads[h]
            s_src = z @ a_heads[h, 0]
            s_dst = z @ a_heads[h, 1]
            e = s_dst[:, None] + s_src[None, :]
            e = jnp.where(e > 0, e, 0.01 * e)
            e = jnp.where(mask, e, -jnp.inf)
            alpha = jax.nn.softmax(e, axis=1)
            hh = alpha @ z
            hh = jnp.where(hh > 0, hh, jnp.exp(jnp.minimum(hh, 0.0)) - 1.0)  # elu
            hh = 0.5 * hh + 0.5 * x                                          # residual
            outs.append(hh)
        m = jnp.mean(jnp.stack(outs), axis=0)                                # merge='mean'
        x = jnp.where(m > 0, m, 0.01 * m)                                    # LeakyReLU
    return x


if __name__ == "__main__":
    # Small synthetic config: 16 nodes, in_feat_dim=32, num_heads=4, num_layers=2.
    N, D, NUM_HEADS, NUM_LAYERS = 16, 32, 4, 2

    key = jax.random.PRNGKey(0)
    k_x, k_adj, k_param = jax.random.split(key, 3)

    in_feat = jax.random.normal(k_x, (N, D), jnp.float32)

    # Random graph with guaranteed self-loops (every node has an in-edge).
    adj_rand = jax.random.uniform(k_adj, (N, N)) > 0.6
    adj = (adj_rand | jnp.eye(N, dtype=bool)).astype(jnp.float32)

    # Deterministic xavier-normal-style init (gain for leaky_relu).
    gain = (2.0 / (1.0 + 0.01 ** 2)) ** 0.5
    std_w = gain * (2.0 / (D + D)) ** 0.5
    std_a = gain * (2.0 / (2 * D + 1)) ** 0.5
    params = []
    for _ in range(NUM_LAYERS):
        k_w, k_a, k_param = jax.random.split(k_param, 3)
        w_heads = std_w * jax.random.normal(k_w, (NUM_HEADS, D, D), jnp.float32)
        a_heads = std_a * jax.random.normal(k_a, (NUM_HEADS, 2, D), jnp.float32)
        params.append((w_heads, a_heads))

    out = jax.block_until_ready(gat_net_pallas(in_feat, params, adj, NUM_HEADS))
    ref = jax.block_until_ready(gat_net_ref(in_feat, params, adj, NUM_HEADS))

    assert out.shape == (N, D), out.shape
    # Tolerance sized for the bf16 (8-bit mantissa) aggregation matmul and the
    # EUP approximate reciprocal; the fc / score matmuls stay f32 so the
    # attention logits are exact.
    max_err = float(jnp.max(jnp.abs(out - ref)))
    assert jnp.allclose(out, ref, atol=4e-2, rtol=4e-2), max_err
    print("KERNEL_OK")
</pallas_src>

<mosaic_0001>
module attributes {stable_mosaic.version = 11 : i64} {
  func.func @_gat_net_kernel(%arg0: i32, %arg1: memref<16x128xf32, #tpu.memory_space<vmem>>, %arg2: memref<1x128x128xf32, #tpu.memory_space<vmem>>, %arg3: memref<1x4x128xf32, #tpu.memory_space<vmem>>, %arg4: memref<1x4x128xf32, #tpu.memory_space<vmem>>, %arg5: memref<16x16xf32, #tpu.memory_space<vmem>>, %arg6: memref<4x128xf32, #tpu.memory_space<vmem>>, %arg7: memref<128x128xf32, #tpu.memory_space<vmem>>, %arg8: memref<16x128xf32, #tpu.memory_space<vmem>>) attributes {dimension_semantics = [#tpu.dimension_semantics<arbitrary>], iteration_bounds = array<i64: 2>, scalar_prefetch = 0 : i64, scratch_operands = 0 : i64, tpu.core_type = #tpu.core_type<tc>, window_params = [{pipeline_mode = #tpu.pipeline_mode<synchronous>, transform_indices = @transform_0, window_bounds = array<i64: 16, 128>}, {transform_indices = @transform_1, window_bounds = array<i64: 1, 128, 128>}, {transform_indices = @transform_2, window_bounds = array<i64: 1, 4, 128>}, {transform_indices = @transform_3, window_bounds = array<i64: 1, 4, 128>}, {pipeline_mode = #tpu.pipeline_mode<synchronous>, transform_indices = @transform_4, window_bounds = array<i64: 16, 16>}, {pipeline_mode = #tpu.pipeline_mode<synchronous>, transform_indices = @transform_5, window_bounds = array<i64: 4, 128>}, {pipeline_mode = #tpu.pipeline_mode<synchronous>, transform_indices = @transform_6, window_bounds = array<i64: 128, 128>}, {pipeline_mode = #tpu.pipeline_mode<synchronous>, transform_indices = @transform_7, window_bounds = array<i64: 16, 128>}]} {
    %c0_i32 = arith.constant 0 : i32
    %0 = arith.cmpi eq, %arg0, %c0_i32 : i32
    %1 = arith.extui %0 : i1 to i32
    %c0_i32_0 = arith.constant 0 : i32
    %2 = arith.cmpi ne, %1, %c0_i32_0 : i32
    scf.if %2 {
      %c0_51 = arith.constant 0 : index
      %c0_52 = arith.constant 0 : index
      %144 = vector.load %arg1[%c0_51, %c0_52] : memref<16x128xf32, #tpu.memory_space<vmem>>, vector<16x128xf32>
      %c0_53 = arith.constant 0 : index
      %c0_54 = arith.constant 0 : index
      %145 = vector.load %arg8[%c0_53, %c0_54] : memref<16x128xf32, #tpu.memory_space<vmem>>, vector<16x128xf32>
      tpu.vector_store %arg8[%c0_53, %c0_54], %144 {strides = array<i32>} : memref<16x128xf32, #tpu.memory_space<vmem>>, vector<16x128xf32>,
    } else {
    }
    %c0 = arith.constant 0 : index
    %c0_1 = arith.constant 0 : index
    %3 = vector.load %arg8[%c0, %c0_1] : memref<16x128xf32, #tpu.memory_space<vmem>>, vector<16x128xf32>
    %c0_2 = arith.constant 0 : index
    %c0_3 = arith.constant 0 : index
    %4 = vector.load %arg5[%c0_2, %c0_3] : memref<16x16xf32, #tpu.memory_space<vmem>>, vector<16x16xf32>
    %c0_4 = arith.constant 0 : index
    %c0_5 = arith.constant 0 : index
    %c0_6 = arith.constant 0 : index
    %5 = vector.load %arg2[%c0_4, %c0_5, %c0_6] : memref<1x128x128xf32, #tpu.memory_space<vmem>>, vector<1x128x128xf32>
    %6 = vector.shape_cast %5 : vector<1x128x128xf32> to vector<128x128xf32>
    %cst = arith.constant dense<0.000000e+00> : vector<16x128xf32>
    %7 = tpu.matmul %3, %6, %cst {dimension_numbers = #tpu.dot_dimension_numbers<[1], [0], [0], [1], [0, 0, 1, 1], [], []>} : vector<16x128xf32>, vector<128x128xf32>, vector<16x128xf32> -> vector<16x128xf32>
    %c0_7 = arith.constant 0 : index
    %c0_8 = arith.constant 0 : index
    %c0_9 = arith.constant 0 : index
    %8 = vector.load %arg3[%c0_7, %c0_8, %c0_9] : memref<1x4x128xf32, #tpu.memory_space<vmem>>, vector<1x4x128xf32>
    %9 = vector.shape_cast %8 : vector<1x4x128xf32> to vector<4x128xf32>
    %cst_10 = arith.constant dense<0.000000e+00> : vector<4x16xf32>
    %10 = tpu.matmul %9, %7, %cst_10 {dimension_numbers = #tpu.dot_dimension_numbers<[1], [1], [0], [0], [0, 0, 1, 0], [], []>} : vector<4x128xf32>, vector<16x128xf32>, vector<4x16xf32> -> vector<4x16xf32>
    %c0_11 = arith.constant 0 : index
    %c0_12 = arith.constant 0 : index
    %c0_13 = arith.constant 0 : index
    %11 = vector.load %arg4[%c0_11, %c0_12, %c0_13] : memref<1x4x128xf32, #tpu.memory_space<vmem>>, vector<1x4x128xf32>
    %12 = vector.shape_cast %11 : vector<1x4x128xf32> to vector<4x128xf32>
    %cst_14 = arith.constant dense<0.000000e+00> : vector<16x4xf32>
    %13 = tpu.matmul %7, %12, %cst_14 {dimension_numbers = #tpu.dot_dimension_numbers<[1], [1], [0], [0], [0, 0, 1, 0], [], []>} : vector<16x128xf32>, vector<4x128xf32>, vector<16x4xf32> -> vector<16x4xf32>
    %cst_15 = arith.constant 0.000000e+00 : f32
    %14 = vector.broadcast %cst_15 : f32 to vector<16x128xf32>
    %15 = vector.extract_strided_slice %13 {offsets = [0, 0], sizes = [16, 1], strides = [1, 1]} : vector<16x4xf32> to vector<16x1xf32>
    %16 = vector.extract_strided_slice %10 {offsets = [0, 0], sizes = [1, 16], strides = [1, 1]} : vector<4x16xf32> to vector<1x16xf32>
    %17 = vector.broadcast %15 : vector<16x1xf32> to vector<16x16xf32>
    %18 = vector.broadcast %16 : vector<1x16xf32> to vector<16x16xf32>
    %19 = arith.addf %17, %18 : vector<16x16xf32>
    %cst_16 = arith.constant 0.00999999977 : f32
    %20 = vector.broadcast %cst_16 : f32 to vector<16x16xf32>
    %21 = arith.mulf %20, %19 : vector<16x16xf32>
    %22 = arith.maximumf %19, %21 : vector<16x16xf32>
    %23 = arith.addf %22, %4 : vector<16x16xf32>
    %cst_17 = arith.constant dense<0xFF800000> : vector<16xf32>
    %24 = vector.multi_reduction <maximumf>, %23, %cst_17 [1] : vector<16x16xf32> to vector<16xf32>
    %25 = vector.shape_cast %24 : vector<16xf32> to vector<16x1xf32>
    %26 = vector.broadcast %25 : vector<16x1xf32> to vector<16x16xf32>
    %27 = arith.subf %23, %26 : vector<16x16xf32>
    %28 = math.exp %27 : vector<16x16xf32>
    %cst_18 = arith.constant dense<0.000000e+00> : vector<16xf32>
    %29 = vector.multi_reduction <add>, %28, %cst_18 [1] : vector<16x16xf32> to vector<16xf32>
    %30 = vector.shape_cast %29 : vector<16xf32> to vector<16x1xf32>
    %cst_19 = arith.constant 1.000000e-30 : f32
    %31 = vector.broadcast %cst_19 : f32 to vector<16x1xf32>
    %32 = arith.maximumf %30, %31 : vector<16x1xf32>
    %33 = tpu.reciprocal %32 {approx = true} : vector<16x1xf32> -> vector<16x1xf32>
    %c0_20 = arith.constant 0 : index
    %c0_21 = arith.constant 0 : index
    %34 = vector.load %arg6[%c0_20, %c0_21] : memref<4x128xf32, #tpu.memory_space<vmem>>, vector<1x128xf32>
    %35 = vector.broadcast %34 : vector<1x128xf32> to vector<16x128xf32>
    %36 = arith.mulf %7, %35 : vector<16x128xf32>
    %37 = arith.truncf %36 : vector<16x128xf32> to vector<16x128xbf16>
    %38 = arith.truncf %28 : vector<16x16xf32> to vector<16x16xbf16>
    %cst_22 = arith.constant dense<0.000000e+00> : vector<16x128xf32>
    %39 = tpu.matmul %38, %37, %cst_22 {dimension_numbers = #tpu.dot_dimension_numbers<[1], [0], [0], [1], [0, 0, 1, 1], [], []>} : vector<16x16xbf16>, vector<16x128xbf16>, vector<16x128xf32> -> vector<16x128xf32>
    %40 = vector.broadcast %33 : vector<16x1xf32> to vector<16x128xf32>
    %41 = arith.mulf %39, %40 : vector<16x128xf32>
    %42 = arith.addf %14, %41 : vector<16x128xf32>
    %43 = vector.extract_strided_slice %13 {offsets = [0, 1], sizes = [16, 1], strides = [1, 1]} : vector<16x4xf32> to vector<16x1xf32>
    %44 = vector.extract_strided_slice %10 {offsets = [1, 0], sizes = [1, 16], strides = [1, 1]} : vector<4x16xf32> to vector<1x16xf32>
    %45 = vector.broadcast %43 : vector<16x1xf32> to vector<16x16xf32>
    %46 = vector.broadcast %44 : vector<1x16xf32> to vector<16x16xf32>
    %47 = arith.addf %45, %46 : vector<16x16xf32>
    %cst_23 = arith.constant 0.00999999977 : f32
    %48 = vector.broadcast %cst_23 : f32 to vector<16x16xf32>
    %49 = arith.mulf %48, %47 : vector<16x16xf32>
    %50 = arith.maximumf %47, %49 : vector<16x16xf32>
    %51 = arith.addf %50, %4 : vector<16x16xf32>
    %cst_24 = arith.constant dense<0xFF800000> : vector<16xf32>
    %52 = vector.multi_reduction <maximumf>, %51, %cst_24 [1] : vector<16x16xf32> to vector<16xf32>
    %53 = vector.shape_cast %52 : vector<16xf32> to vector<16x1xf32>
    %54 = vector.broadcast %53 : vector<16x1xf32> to vector<16x16xf32>
    %55 = arith.subf %51, %54 : vector<16x16xf32>
    %56 = math.exp %55 : vector<16x16xf32>
    %cst_25 = arith.constant dense<0.000000e+00> : vector<16xf32>
    %57 = vector.multi_reduction <add>, %56, %cst_25 [1] : vector<16x16xf32> to vector<16xf32>
    %58 = vector.shape_cast %57 : vector<16xf32> to vector<16x1xf32>
    %cst_26 = arith.constant 1.000000e-30 : f32
    %59 = vector.broadcast %cst_26 : f32 to vector<16x1xf32>
    %60 = arith.maximumf %58, %59 : vector<16x1xf32>
    %61 = tpu.reciprocal %60 {approx = true} : vector<16x1xf32> -> vector<16x1xf32>
    %c1 = arith.constant 1 : index
    %c0_27 = arith.constant 0 : index
    %62 = vector.load %arg6[%c1, %c0_27] : memref<4x128xf32, #tpu.memory_space<vmem>>, vector<1x128xf32>
    %63 = vector.broadcast %62 : vector<1x128xf32> to vector<16x128xf32>
    %64 = arith.mulf %7, %63 : vector<16x128xf32>
    %65 = arith.truncf %64 : vector<16x128xf32> to vector<16x128xbf16>
    %66 = arith.truncf %56 : vector<16x16xf32> to vector<16x16xbf16>
    %cst_28 = arith.constant dense<0.000000e+00> : vector<16x128xf32>
    %67 = tpu.matmul %66, %65, %cst_28 {dimension_numbers = #tpu.dot_dimension_numbers<[1], [0], [0], [1], [0, 0, 1, 1], [], []>} : vector<16x16xbf16>, vector<16x128xbf16>, vector<16x128xf32> -> vector<16x128xf32>
    %68 = vector.broadcast %61 : vector<16x1xf32> to vector<16x128xf32>
    %69 = arith.mulf %67, %68 : vector<16x128xf32>
    %70 = arith.addf %42, %69 : vector<16x128xf32>
    %71 = vector.extract_strided_slice %13 {offsets = [0, 2], sizes = [16, 1], strides = [1, 1]} : vector<16x4xf32> to vector<16x1xf32>
    %72 = vector.extract_strided_slice %10 {offsets = [2, 0], sizes = [1, 16], strides = [1, 1]} : vector<4x16xf32> to vector<1x16xf32>
    %73 = vector.broadcast %71 : vector<16x1xf32> to vector<16x16xf32>
    %74 = vector.broadcast %72 : vector<1x16xf32> to vector<16x16xf32>
    %75 = arith.addf %73, %74 : vector<16x16xf32>
    %cst_29 = arith.constant 0.00999999977 : f32
    %76 = vector.broadcast %cst_29 : f32 to vector<16x16xf32>
    %77 = arith.mulf %76, %75 : vector<16x16xf32>
    %78 = arith.maximumf %75, %77 : vector<16x16xf32>
    %79 = arith.addf %78, %4 : vector<16x16xf32>
    %cst_30 = arith.constant dense<0xFF800000> : vector<16xf32>
    %80 = vector.multi_reduction <maximumf>, %79, %cst_30 [1] : vector<16x16xf32> to vector<16xf32>
    %81 = vector.shape_cast %80 : vector<16xf32> to vector<16x1xf32>
    %82 = vector.broadcast %81 : vector<16x1xf32> to vector<16x16xf32>
    %83 = arith.subf %79, %82 : vector<16x16xf32>
    %84 = math.exp %83 : vector<16x16xf32>
    %cst_31 = arith.constant dense<0.000000e+00> : vector<16xf32>
    %85 = vector.multi_reduction <add>, %84, %cst_31 [1] : vector<16x16xf32> to vector<16xf32>
    %86 = vector.shape_cast %85 : vector<16xf32> to vector<16x1xf32>
    %cst_32 = arith.constant 1.000000e-30 : f32
    %87 = vector.broadcast %cst_32 : f32 to vector<16x1xf32>
    %88 = arith.maximumf %86, %87 : vector<16x1xf32>
    %89 = tpu.reciprocal %88 {approx = true} : vector<16x1xf32> -> vector<16x1xf32>
    %c2 = arith.constant 2 : index
    %c0_33 = arith.constant 0 : index
    %90 = vector.load %arg6[%c2, %c0_33] : memref<4x128xf32, #tpu.memory_space<vmem>>, vector<1x128xf32>
    %91 = vector.broadcast %90 : vector<1x128xf32> to vector<16x128xf32>
    %92 = arith.mulf %7, %91 : vector<16x128xf32>
    %93 = arith.truncf %92 : vector<16x128xf32> to vector<16x128xbf16>
    %94 = arith.truncf %84 : vector<16x16xf32> to vector<16x16xbf16>
    %cst_34 = arith.constant dense<0.000000e+00> : vector<16x128xf32>
    %95 = tpu.matmul %94, %93, %cst_34 {dimension_numbers = #tpu.dot_dimension_numbers<[1], [0], [0], [1], [0, 0, 1, 1], [], []>} : vector<16x16xbf16>, vector<16x128xbf16>, vector<16x128xf32> -> vector<16x128xf32>
    %96 = vector.broadcast %89 : vector<16x1xf32> to vector<16x128xf32>
    %97 = arith.mulf %95, %96 : vector<16x128xf32>
    %98 = arith.addf %70, %97 : vector<16x128xf32>
    %99 = vector.extract_strided_slice %13 {offsets = [0, 3], sizes = [16, 1], strides = [1, 1]} : vector<16x4xf32> to vector<16x1xf32>
    %100 = vector.extract_strided_slice %10 {offsets = [3, 0], sizes = [1, 16], strides = [1, 1]} : vector<4x16xf32> to vector<1x16xf32>
    %101 = vector.broadcast %99 : vector<16x1xf32> to vector<16x16xf32>
    %102 = vector.broadcast %100 : vector<1x16xf32> to vector<16x16xf32>
    %103 = arith.addf %101, %102 : vector<16x16xf32>
    %cst_35 = arith.constant 0.00999999977 : f32
    %104 = vector.broadcast %cst_35 : f32 to vector<16x16xf32>
    %105 = arith.mulf %104, %103 : vector<16x16xf32>
    %106 = arith.maximumf %103, %105 : vector<16x16xf32>
    %107 = arith.addf %106, %4 : vector<16x16xf32>
    %cst_36 = arith.constant dense<0xFF800000> : vector<16xf32>
    %108 = vector.multi_reduction <maximumf>, %107, %cst_36 [1] : vector<16x16xf32> to vector<16xf32>
    %109 = vector.shape_cast %108 : vector<16xf32> to vector<16x1xf32>
    %110 = vector.broadcast %109 : vector<16x1xf32> to vector<16x16xf32>
    %111 = arith.subf %107, %110 : vector<16x16xf32>
    %112 = math.exp %111 : vector<16x16xf32>
    %cst_37 = arith.constant dense<0.000000e+00> : vector<16xf32>
    %113 = vector.multi_reduction <add>, %112, %cst_37 [1] : vector<16x16xf32> to vector<16xf32>
    %114 = vector.shape_cast %113 : vector<16xf32> to vector<16x1xf32>
    %cst_38 = arith.constant 1.000000e-30 : f32
    %115 = vector.broadcast %cst_38 : f32 to vector<16x1xf32>
    %116 = arith.maximumf %114, %115 : vector<16x1xf32>
    %117 = tpu.reciprocal %116 {approx = true} : vector<16x1xf32> -> vector<16x1xf32>
    %c3 = arith.constant 3 : index
    %c0_39 = arith.constant 0 : index
    %118 = vector.load %arg6[%c3, %c0_39] : memref<4x128xf32, #tpu.memory_space<vmem>>, vector<1x128xf32>
    %119 = vector.broadcast %118 : vector<1x128xf32> to vector<16x128xf32>
    %120 = arith.mulf %7, %119 : vector<16x128xf32>
    %121 = arith.truncf %120 : vector<16x128xf32> to vector<16x128xbf16>
    %122 = arith.truncf %112 : vector<16x16xf32> to vector<16x16xbf16>
    %cst_40 = arith.constant dense<0.000000e+00> : vector<16x128xf32>
    %123 = tpu.matmul %122, %121, %cst_40 {dimension_numbers = #tpu.dot_dimension_numbers<[1], [0], [0], [1], [0, 0, 1, 1], [], []>} : vector<16x16xbf16>, vector<16x128xbf16>, vector<16x128xf32> -> vector<16x128xf32>
    %124 = vector.broadcast %117 : vector<16x1xf32> to vector<16x128xf32>
    %125 = arith.mulf %123, %124 : vector<16x128xf32>
    %126 = arith.addf %98, %125 : vector<16x128xf32>
    %cst_41 = arith.constant 0.000000e+00 : f32
    %127 = vector.broadcast %cst_41 : f32 to vector<16x128xf32>
    %128 = arith.cmpf ogt, %126, %127 : vector<16x128xf32>
    %cst_42 = arith.constant 0.000000e+00 : f32
    %129 = vector.broadcast %cst_42 : f32 to vector<16x128xf32>
    %130 = arith.minimumf %126, %129 : vector<16x128xf32>
    %131 = math.exp %130 : vector<16x128xf32>
    %cst_43 = arith.constant 1.000000e+00 : f32
    %132 = vector.broadcast %cst_43 : f32 to vector<16x128xf32>
    %133 = arith.subf %131, %132 : vector<16x128xf32>
    %134 = arith.select %128, %126, %133 : vector<16x128xi1>, vector<16x128xf32>
    %c0_44 = arith.constant 0 : index
    %c0_45 = arith.constant 0 : index
    %135 = vector.load %arg7[%c0_44, %c0_45] : memref<128x128xf32, #tpu.memory_space<vmem>>, vector<128x128xf32>
    %cst_46 = arith.constant dense<0.000000e+00> : vector<16x128xf32>
    %136 = tpu.matmul %134, %135, %cst_46 {dimension_numbers = #tpu.dot_dimension_numbers<[1], [0], [0], [1], [0, 0, 1, 1], [], []>} : vector<16x128xf32>, vector<128x128xf32>, vector<16x128xf32> -> vector<16x128xf32>
    %cst_47 = arith.constant 5.000000e-01 : f32
    %137 = vector.broadcast %cst_47 : f32 to vector<16x128xf32>
    %138 = arith.mulf %137, %3 : vector<16x128xf32>
    %139 = arith.addf %136, %138 : vector<16x128xf32>
    %cst_48 = arith.constant 0.00999999977 : f32
    %140 = vector.broadcast %cst_48 : f32 to vector<16x128xf32>
    %141 = arith.mulf %140, %139 : vector<16x128xf32>
    %142 = arith.maximumf %139, %141 : vector<16x128xf32>
    %c0_49 = arith.constant 0 : index
    %c0_50 = arith.constant 0 : index
    %143 = vector.load %arg8[%c0_49, %c0_50] : memref<16x128xf32, #tpu.memory_space<vmem>>, vector<16x128xf32>
    tpu.vector_store %arg8[%c0_49, %c0_50], %142 {strides = array<i32>} : memref<16x128xf32, #tpu.memory_space<vmem>>, vector<16x128xf32>,
    return
  }
  func.func @transform_0(%arg0: i32) -> (i32, i32) {
    %c0_i32 = arith.constant 0 : i32
    %c0_i32_0 = arith.constant 0 : i32
    %c0_i32_1 = arith.constant 0 : i32
    return %c0_i32, %c0_i32_0 : i32, i32
  }
  func.func @transform_1(%arg0: i32) -> (i32, i32, i32) {
    %c0_i32 = arith.constant 0 : i32
    %c0_i32_0 = arith.constant 0 : i32
    %c0_i32_1 = arith.constant 0 : i32
    return %arg0, %c0_i32, %c0_i32_0 : i32, i32, i32
  }
  func.func @transform_2(%arg0: i32) -> (i32, i32, i32) {
    %c0_i32 = arith.constant 0 : i32
    %c0_i32_0 = arith.constant 0 : i32
    %c0_i32_1 = arith.constant 0 : i32
    return %arg0, %c0_i32, %c0_i32_0 : i32, i32, i32
  }
  func.func @transform_3(%arg0: i32) -> (i32, i32, i32) {
    %c0_i32 = arith.constant 0 : i32
    %c0_i32_0 = arith.constant 0 : i32
    %c0_i32_1 = arith.constant 0 : i32
    return %arg0, %c0_i32, %c0_i32_0 : i32, i32, i32
  }
  func.func @transform_4(%arg0: i32) -> (i32, i32) {
    %c0_i32 = arith.constant 0 : i32
    %c0_i32_0 = arith.constant 0 : i32
    %c0_i32_1 = arith.constant 0 : i32
    return %c0_i32, %c0_i32_0 : i32, i32
  }
  func.func @transform_5(%arg0: i32) -> (i32, i32) {
    %c0_i32 = arith.constant 0 : i32
    %c0_i32_0 = arith.constant 0 : i32
    %c0_i32_1 = arith.constant 0 : i32
    return %c0_i32, %c0_i32_0 : i32, i32
  }
  func.func @transform_6(%arg0: i32) -> (i32, i32) {
    %c0_i32 = arith.constant 0 : i32
    %c0_i32_0 = arith.constant 0 : i32
    %c0_i32_1 = arith.constant 0 : i32
    return %c0_i32, %c0_i32_0 : i32, i32
  }
  func.func @transform_7(%arg0: i32) -> (i32, i32) {
    %c0_i32 = arith.constant 0 : i32
    %c0_i32_0 = arith.constant 0 : i32
    %c0_i32_1 = arith.constant 0 : i32
    return %c0_i32, %c0_i32_0 : i32, i32
  }
}

</mosaic_0001>

<llo_original>
// kernel: tpu_custom_call.1
$region0: #{tpu_custom_call.1}
  #allocation0 [shape = 'u32[]', space=smem, size = 0x4, offset = 0x4, fixed_abs, tag = 'smem constant byte address 0x4 - core index']
  #allocation1 [shape = 'u32[144,128]{1,0:T(1,128)}', space=vmem, size = 0x12000, scoped, tag = 'internal scratch']
  %s0 = inlined_call_operand.hbm [shape: f32[16,128], index: 0, kind: input, shape index: {}]
  %s1 = inlined_call_operand.hbm [shape: f32[2,128,128], index: 1, kind: input, shape index: {}]
  %s2 = inlined_call_operand.hbm [shape: f32[2,4,128], index: 2, kind: input, shape index: {}]
  %s3 = inlined_call_operand.vmem [shape: f32[2,4,128], index: 3, kind: input, shape index: {}]
  %s4 = inlined_call_operand.hbm [shape: f32[16,16], index: 4, kind: input, shape index: {}]
  %s5 = inlined_call_operand.vmem [shape: f32[4,128], index: 5, kind: input, shape index: {}]
  %s6 = inlined_call_operand.hbm [shape: f32[128,128], index: 6, kind: input, shape index: {}]
  %s7 = inlined_call_operand.hbm [shape: f32[16,128], index: 7, kind: output, shape index: {}]
  %s8 = sld [smem:[#allocation0]]
  $region85: #{tpu_custom_call.1} parent=0
    _
  %s10 = ssub.s32 1, %s8
  %s11 = scalar_select 0, %s10, %s8
  $region1: #{tpu_custom_call.1} parent=0
    #allocation2 [shape = 'u8[8192]{0}', space=vmem, size = 0x2000, scoped, tag = 'input window, operand 0, single buffered']
    #allocation3 [shape = 's32[2]{0}', space=sflag, size = 0x8, scoped, tag = 'scoped memory for tpu_custom_call.1']
    #allocation4 [shape = 's32[2]{0}', space=sflag, size = 0x8, scoped, tag = 'scoped memory for tpu_custom_call.1']
    #allocation5 [shape = 'u8[131072]{0}', space=vmem, size = 0x20000, scoped, tag = 'input window, operand 1']
    #allocation6 [shape = 's32[2]{0}', space=sflag, size = 0x8, scoped, tag = 'scoped memory for tpu_custom_call.1']
    #allocation7 [shape = 'u8[4096]{0}', space=vmem, size = 0x1000, scoped, tag = 'input window, operand 2']
    #allocation8 [shape = 'u8[8192]{0}', space=vmem, size = 0x2000, scoped, tag = 'input window, operand 4, single buffered']
    #allocation9 [shape = 's32[1]{0}', space=sflag, size = 0x4, scoped, tag = 'scoped memory for tpu_custom_call.1']
    #allocation10 [shape = 'u8[65536]{0}', space=vmem, size = 0x10000, scoped, tag = 'input window, operand 6, single buffered']
    #allocation11 [shape = 'u8[8192]{0}', space=vmem, size = 0x2000, scoped, tag = 'output window, operand 0, single buffered']
    %12 = vsyncpa [#allocation3], 0
    %13 = vsyncpa [#allocation6], 0
    %s14 = scalar_lea.sflag [#allocation6], 1
    %15 = vsyncpa %s14, 0
    %16 = vsyncpa [#allocation9], 0
    %17 = vsyncpa [#allocation4], 0
    loop: start=0, step=1, limit=4
    $region2: #{tpu_custom_call.1} parent=1 // loop_pre_header
      _
    $region3: #{tpu_custom_call.1} parent=1 // loop_header
      %s19 = sphi 0, %s23
      %p20 = scmp.ge.s32.totalorder %s19, 4
      %s27 = sphi 0, %s27
      %s29 = sphi 0, %s27
      %s30 = sphi 0, %s29
      %s44 = sphi 0, %s30
      %s50 = sphi 0, %s52
      %s53 = sphi 0, %s50
      %s54 = sphi 0, %s53
      %s70 = sphi 0, %s54
      %s76 = sphi 0, %s78
      %s79 = sphi 0, %s76
      %s80 = sphi 0, %s79
      %s96 = sphi 0, %s80
      %s102 = sphi 0, %s104
      %s105 = sphi 0, %s102
      %s106 = sphi 0, %s105
      %s122 = sphi 0, %s106
      %s126 = sphi 0, %s126
      %s128 = sphi 0, %s126
      %s129 = sphi 0, %s128
      %s143 = sphi 0, %s129
      %s147 = sphi 0, %s147
      %s149 = sphi 0, %s147
      %s150 = sphi 0, %s149
      %s164 = sphi 0, %s150
      %s168 = sphi 0, %s168
      %s170 = sphi 0, %s168
      %s171 = sphi 0, %s170
      %s185 = sphi 0, %s171
      %s189 = sphi 0, %s189
      %s191 = sphi 0, %s189
      %s192 = sphi 0, %s191
      %s206 = sphi 0, %s192
    $region4: #{tpu_custom_call.1} parent=1 // loop_header_branch
      %22 = sbr.rel (%p20) target = $region8
    $region5: #{tpu_custom_call.1} parent=1 // loop_body
      %s24 = ssub.s32 %s19, 1
      %s25 = ssub.s32 %s19, 2
      %s26 = sadd.s32 %s19, 1
      %s28 = sadd.s32 %s27, 1
      %p31 = scmp.eq.s32.totalorder %s19, 1
      %p32 = scmp.ne.s32.totalorder %s27, %s29
      %p33 = scmp.eq.s32.totalorder %s19, 0
      %p34 = por %p32, %p33
      %p35 = scmp.ne.s32.totalorder %s27, %s29
      %p36 = scmp.eq.s32.totalorder %s24, 1
      %p37 = por %p35, %p36
      %p38 = scmp.ne.s32.totalorder %s29, %s30
      %p39 = scmp.eq.s32.totalorder %s24, 0
      %p40 = por %p38, %p39
      %p41 = scmp.ne.s32.totalorder %s29, %s30
      %p42 = scmp.eq.s32.totalorder %s25, 1
      %p43 = por %p41, %p42
      %p45 = scmp.ne.s32.totalorder %s30, %s44
      %p46 = scmp.eq.s32.totalorder %s25, 0
      %p47 = por %p45, %p46
      %s48 = ssub.s32 %s19, %s26
      %p49 = scmp.eq.s32.totalorder %s48, 0
      %s51 = sadd.s32 %s50, 1
      %s52 = scalar_select %p49, %s50, %s51
      %p55 = pneg %p49
      %p56 = scmp.eq.s32.totalorder %s19, 1
      %p57 = por %p55, %p56
      %p58 = scmp.ne.s32.totalorder %s50, %s53
      %p59 = scmp.eq.s32.totalorder %s19, 0
      %p60 = por %p58, %p59
      %p61 = scmp.ne.s32.totalorder %s50, %s53
      %p62 = scmp.eq.s32.totalorder %s24, 1
      %p63 = por %p61, %p62
      %p64 = scmp.ne.s32.totalorder %s53, %s54
      %p65 = scmp.eq.s32.totalorder %s24, 0
      %p66 = por %p64, %p65
      %p67 = scmp.ne.s32.totalorder %s53, %s54
      %p68 = scmp.eq.s32.totalorder %s25, 1
      %p69 = por %p67, %p68
      %p71 = scmp.ne.s32.totalorder %s54, %s70
      %p72 = scmp.eq.s32.totalorder %s25, 0
      %p73 = por %p71, %p72
      %s74 = ssub.s32 %s19, %s26
      %p75 = scmp.eq.s32.totalorder %s74, 0
      %s77 = sadd.s32 %s76, 1
      %s78 = scalar_select %p75, %s76, %s77
      %p81 = pneg %p75
      %p82 = scmp.eq.s32.totalorder %s19, 1
      %p83 = por %p81, %p82
      %p84 = scmp.ne.s32.totalorder %s76, %s79
      %p85 = scmp.eq.s32.totalorder %s19, 0
      %p86 = por %p84, %p85
      %p87 = scmp.ne.s32.totalorder %s76, %s79
      %p88 = scmp.eq.s32.totalorder %s24, 1
      %p89 = por %p87, %p88
      %p90 = scmp.ne.s32.totalorder %s79, %s80
      %p91 = scmp.eq.s32.totalorder %s24, 0
      %p92 = por %p90, %p91
      %p93 = scmp.ne.s32.totalorder %s79, %s80
      %p94 = scmp.eq.s32.totalorder %s25, 1
      %p95 = por %p93, %p94
      %p97 = scmp.ne.s32.totalorder %s80, %s96
      %p98 = scmp.eq.s32.totalorder %s25, 0
      %p99 = por %p97, %p98
      %s100 = ssub.s32 %s19, %s26
      %p101 = scmp.eq.s32.totalorder %s100, 0
      %s103 = sadd.s32 %s102, 1
      %s104 = scalar_select %p101, %s102, %s103
      %p107 = pneg %p101
      %p108 = scmp.eq.s32.totalorder %s19, 1
      %p109 = por %p107, %p108
      %p110 = scmp.ne.s32.totalorder %s102, %s105
      %p111 = scmp.eq.s32.totalorder %s19, 0
      %p112 = por %p110, %p111
      %p113 = scmp.ne.s32.totalorder %s102, %s105
      %p114 = scmp.eq.s32.totalorder %s24, 1
      %p115 = por %p113, %p114
      %p116 = scmp.ne.s32.totalorder %s105, %s106
      %p117 = scmp.eq.s32.totalorder %s24, 0
      %p118 = por %p116, %p117
      %p119 = scmp.ne.s32.totalorder %s105, %s106
      %p120 = scmp.eq.s32.totalorder %s25, 1
      %p121 = por %p119, %p120
      %p123 = scmp.ne.s32.totalorder %s106, %s122
      %p124 = scmp.eq.s32.totalorder %s25, 0
      %p125 = por %p123, %p124
      %s127 = sadd.s32 %s126, 1
      %p130 = scmp.eq.s32.totalorder %s19, 1
      %p131 = scmp.ne.s32.totalorder %s126, %s128
      %p132 = scmp.eq.s32.totalorder %s19, 0
      %p133 = por %p131, %p132
      %p134 = scmp.ne.s32.totalorder %s126, %s128
      %p135 = scmp.eq.s32.totalorder %s24, 1
      %p136 = por %p134, %p135
      %p137 = scmp.ne.s32.totalorder %s128, %s129
      %p138 = scmp.eq.s32.totalorder %s24, 0
      %p139 = por %p137, %p138
      %p140 = scmp.ne.s32.totalorder %s128, %s129
      %p141 = scmp.eq.s32.totalorder %s25, 1
      %p142 = por %p140, %p141
      %p144 = scmp.ne.s32.totalorder %s129, %s143
      %p145 = scmp.eq.s32.totalorder %s25, 0
      %p146 = por %p144, %p145
      %s148 = sadd.s32 %s147, 1
      %p151 = scmp.eq.s32.totalorder %s19, 1
      %p152 = scmp.ne.s32.totalorder %s147, %s149
      %p153 = scmp.eq.s32.totalorder %s19, 0
      %p154 = por %p152, %p153
      %p155 = scmp.ne.s32.totalorder %s147, %s149
      %p156 = scmp.eq.s32.totalorder %s24, 1
      %p157 = por %p155, %p156
      %p158 = scmp.ne.s32.totalorder %s149, %s150
      %p159 = scmp.eq.s32.totalorder %s24, 0
      %p160 = por %p158, %p159
      %p161 = scmp.ne.s32.totalorder %s149, %s150
      %p162 = scmp.eq.s32.totalorder %s25, 1
      %p163 = por %p161, %p162
      %p165 = scmp.ne.s32.totalorder %s150, %s164
      %p166 = scmp.eq.s32.totalorder %s25, 0
      %p167 = por %p165, %p166
      %s169 = sadd.s32 %s168, 1
      %p172 = scmp.eq.s32.totalorder %s19, 1
      %p173 = scmp.ne.s32.totalorder %s168, %s170
      %p174 = scmp.eq.s32.totalorder %s19, 0
      %p175 = por %p173, %p174
      %p176 = scmp.ne.s32.totalorder %s168, %s170
      %p177 = scmp.eq.s32.totalorder %s24, 1
      %p178 = por %p176, %p177
      %p179 = scmp.ne.s32.totalorder %s170, %s171
      %p180 = scmp.eq.s32.totalorder %s24, 0
      %p181 = por %p179, %p180
      %p182 = scmp.ne.s32.totalorder %s170, %s171
      %p183 = scmp.eq.s32.totalorder %s25, 1
      %p184 = por %p182, %p183
      %p186 = scmp.ne.s32.totalorder %s171, %s185
      %p187 = scmp.eq.s32.totalorder %s25, 0
      %p188 = por %p186, %p187
      %s190 = sadd.s32 %s189, 1
      %p193 = scmp.eq.s32.totalorder %s19, 1
      %p194 = scmp.ne.s32.totalorder %s189, %s191
      %p195 = scmp.eq.s32.totalorder %s19, 0
      %p196 = por %p194, %p195
      %p197 = scmp.ne.s32.totalorder %s189, %s191
      %p198 = scmp.eq.s32.totalorder %s24, 1
      %p199 = por %p197, %p198
      %p200 = scmp.ne.s32.totalorder %s191, %s192
      %p201 = scmp.eq.s32.totalorder %s24, 0
      %p202 = por %p200, %p201
      %p203 = scmp.ne.s32.totalorder %s191, %s192
      %p204 = scmp.eq.s32.totalorder %s25, 1
      %p205 = por %p203, %p204
      %p207 = scmp.ne.s32.totalorder %s192, %s206
      %p208 = scmp.eq.s32.totalorder %s25, 0
      %p209 = por %p207, %p208
      %p210 = scmp.le.s32.totalorder 1, %s19
      %p211 = scmp.lt.s32.totalorder %s19, 3
      %p212 = pnand %p210, %p211
      %p213 = pneg %p212
      // Predicated region
      $region9: #{tpu_custom_call.1} parent=5 // pred_check
        _
      $region10: #{tpu_custom_call.1} parent=5 // pred_check_branch
        %215 = sbr.rel (%p212) target = $region12
      $region11: #{tpu_custom_call.1} parent=5 // pred_region
        %s216 = ssub.s32 %s19, 1
        // Predicated region
        $region13: #{tpu_custom_call.1} parent=11 // pred_check
          %p217 = pneg %p40
        $region14: #{tpu_custom_call.1} parent=11 // pred_check_branch
          %219 = sbr.rel (%p217) target = $region16
        $region15: #{tpu_custom_call.1} parent=11 // pred_region
          %s221 = ssub.s32 256, 256
          %222 = vsyncadd [#allocation3], %s221
          %s223 = sshll.u32 [#allocation2], 4
          %s224 = int_to_ptr.vmem [resolvable:$true] %s223
          %229 = dma.hbm_to_vmem [thread:$0]  %s0, 256, %s224, [#allocation3], 128, 128, 8
        $region16: #{tpu_custom_call.1} parent=11 // pred_fallthru
          _
        // Predicated region
        $region17: #{tpu_custom_call.1} parent=11 // pred_check
          %p230 = pneg %p139
        $region18: #{tpu_custom_call.1} parent=11 // pred_check_branch
          %232 = sbr.rel (%p230) target = $region20
        $region19: #{tpu_custom_call.1} parent=11 // pred_region
          %s234 = ssub.s32 256, 256
          %235 = vsyncadd [#allocation9], %s234
          %s236 = sshll.u32 [#allocation8], 4
          %s237 = int_to_ptr.vmem [resolvable:$true] %s236
          %242 = dma.hbm_to_vmem [thread:$0]  %s4, 256, %s237, [#allocation9], 128, 128, 8
        $region20: #{tpu_custom_call.1} parent=11 // pred_fallthru
          _
        // Predicated region
        $region21: #{tpu_custom_call.1} parent=11 // pred_check
          %p243 = pneg %p160
        $region22: #{tpu_custom_call.1} parent=11 // pred_check_branch
          %245 = sbr.rel (%p243) target = $region24
        $region23: #{tpu_custom_call.1} parent=11 // pred_region
          _
        $region24: #{tpu_custom_call.1} parent=11 // pred_fallthru
          _
        // Predicated region
        $region25: #{tpu_custom_call.1} parent=11 // pred_check
          %p246 = pneg %p181
        $region26: #{tpu_custom_call.1} parent=11 // pred_check_branch
          %248 = sbr.rel (%p246) target = $region28
        $region27: #{tpu_custom_call.1} parent=11 // pred_region
          %s250 = ssub.s32 2048, 2048
          %251 = vsyncadd [#allocation9], %s250
          %s252 = sshll.u32 [#allocation10], 4
          %s253 = int_to_ptr.vmem [resolvable:$true] %s252
          %258 = dma.hbm_to_vmem [thread:$0]  %s6, 2048, %s253, [#allocation9], 128, 128, 8
        $region28: #{tpu_custom_call.1} parent=11 // pred_fallthru
          _
      $region12: #{tpu_custom_call.1} parent=5 // pred_fallthru
        _
      %p259 = scmp.lt.s32.totalorder %s19, 2
      // Predicated region
      $region29: #{tpu_custom_call.1} parent=5 // pred_check
        %p260 = pneg %p259
      $region30: #{tpu_custom_call.1} parent=5 // pred_check_branch
        %262 = sbr.rel (%p260) target = $region32
      $region31: #{tpu_custom_call.1} parent=5 // pred_region
        // Predicated region
        $region33: #{tpu_custom_call.1} parent=31 // pred_check
          %p263 = pneg %p60
        $region34: #{tpu_custom_call.1} parent=31 // pred_check_branch
          %265 = sbr.rel (%p263) target = $region36
        $region35: #{tpu_custom_call.1} parent=31 // pred_region
          %s266 = sand.u32 %s19, 1
          %s267 = scalar_lea.sflag [#allocation6], %s266
          %s268 = sand.u32 %s50, 1
          %s269 = smul.addr %s268, 128
          %s270 = scalar_lea.vmem [#allocation5], %s269
          %s272 = ssub.s32 2048, 2048
          %273 = vsyncadd %s267, %s272
          %s274 = smul.addr %s19, 16
          %s275 = smul.addr %s274, 128
          %s276 = scalar_lea.hbm %s1, %s275
          %s277 = sshll.u32 %s270, 4
          %s278 = int_to_ptr.vmem [resolvable:$true] %s277
          %283 = dma.hbm_to_vmem [thread:$0]  %s276, 2048, %s278, %s267, 128, 128, 8
        $region36: #{tpu_custom_call.1} parent=31 // pred_fallthru
          _
        // Predicated region
        $region37: #{tpu_custom_call.1} parent=31 // pred_check
          %p284 = pneg %p86
        $region38: #{tpu_custom_call.1} parent=31 // pred_check_branch
          %286 = sbr.rel (%p284) target = $region40
        $region39: #{tpu_custom_call.1} parent=31 // pred_region
          %s287 = sand.u32 %s19, 1
          %s288 = scalar_lea.sflag [#allocation6], %s287
          %s289 = sand.u32 %s76, 1
          %s290 = smul.addr %s289, 4
          %s291 = scalar_lea.vmem [#allocation7], %s290
          %s293 = ssub.s32 64, 64
          %294 = vsyncadd %s288, %s293
          %s295 = smul.addr %s19, 64
          %s296 = scalar_lea.hbm %s2, %s295
          %s298 = sshll.u32 %s291, 4
          %s299 = int_to_ptr.vmem [resolvable:$true] %s298
          %301 = dma.hbm_to_vmem [thread:$0]  %s296, 64, %s299, %s288
        $region40: #{tpu_custom_call.1} parent=31 // pred_fallthru
          _
        // Predicated region
        $region41: #{tpu_custom_call.1} parent=31 // pred_check
          %p302 = pneg %p112
        $region42: #{tpu_custom_call.1} parent=31 // pred_check_branch
          %304 = sbr.rel (%p302) target = $region44
        $region43: #{tpu_custom_call.1} parent=31 // pred_region
          %p305 = scmp.lt.s32.totalorder %s19, 1
          %s306 = scalar_select %p305, %s19, 1
          %s307 = smul.addr %s306, 4
          %s308 = scalar_lea.vmem %s3, %s307
        $region44: #{tpu_custom_call.1} parent=31 // pred_fallthru
          _
      $region32: #{tpu_custom_call.1} parent=5 // pred_fallthru
        _
      %p309 = scmp.le.s32.totalorder 1, %s19
      %p310 = scmp.lt.s32.totalorder %s19, 3
      %p311 = pnand %p309, %p310
      %p312 = pneg %p311
      // Predicated region
      $region45: #{tpu_custom_call.1} parent=5 // pred_check
        _
      $region46: #{tpu_custom_call.1} parent=5 // pred_check_branch
        %314 = sbr.rel (%p311) target = $region48
      $region47: #{tpu_custom_call.1} parent=5 // pred_region
        %s315 = ssub.s32 %s19, 1
        // Predicated region
        $region49: #{tpu_custom_call.1} parent=47 // pred_check
          %p316 = pneg %p40
        $region50: #{tpu_custom_call.1} parent=47 // pred_check_branch
          %318 = sbr.rel (%p316) target = $region52
        $region51: #{tpu_custom_call.1} parent=47 // pred_region
          %319 = dma.done [#allocation3], 256
        $region52: #{tpu_custom_call.1} parent=47 // pred_fallthru
          _
        %s320 = sand.u32 %s24, 1
        %s321 = scalar_lea.sflag [#allocation6], %s320
        %s322 = sand.u32 %s53, 1
        %s323 = smul.addr %s322, 128
        %s324 = scalar_lea.vmem [#allocation5], %s323
        // Predicated region
        $region53: #{tpu_custom_call.1} parent=47 // pred_check
          %p325 = pneg %p66
        $region54: #{tpu_custom_call.1} parent=47 // pred_check_branch
          %327 = sbr.rel (%p325) target = $region56
        $region55: #{tpu_custom_call.1} parent=47 // pred_region
          %328 = dma.done %s321, 2048
        $region56: #{tpu_custom_call.1} parent=47 // pred_fallthru
          _
        %s329 = sand.u32 %s24, 1
        %s330 = scalar_lea.sflag [#allocation6], %s329
        %s331 = sand.u32 %s79, 1
        %s332 = smul.addr %s331, 4
        %s333 = scalar_lea.vmem [#allocation7], %s332
        // Predicated region
        $region57: #{tpu_custom_call.1} parent=47 // pred_check
          %p334 = pneg %p92
        $region58: #{tpu_custom_call.1} parent=47 // pred_check_branch
          %336 = sbr.rel (%p334) target = $region60
        $region59: #{tpu_custom_call.1} parent=47 // pred_region
          %337 = dma.done %s330, 64
        $region60: #{tpu_custom_call.1} parent=47 // pred_fallthru
          _
        // Predicated region
        $region61: #{tpu_custom_call.1} parent=47 // pred_check
          %p338 = pneg %p139
        $region62: #{tpu_custom_call.1} parent=47 // pred_check_branch
          %340 = sbr.rel (%p338) target = $region64
        $region63: #{tpu_custom_call.1} parent=47 // pred_region
          %341 = dma.done [#allocation9], 256
        $region64: #{tpu_custom_call.1} parent=47 // pred_fallthru
          _
        // Predicated region
        $region65: #{tpu_custom_call.1} parent=47 // pred_check
          %p342 = pneg %p181
        $region66: #{tpu_custom_call.1} parent=47 // pred_check_branch
          %344 = sbr.rel (%p342) target = $region68
        $region67: #{tpu_custom_call.1} parent=47 // pred_region
          %345 = dma.done [#allocation9], 2048
        $region68: #{tpu_custom_call.1} parent=47 // pred_fallthru
          _
        %p346 = pneg %p40
        %p347 = pneg %p37
        %s348 = sand.u32 %s24, 1
        %s349 = scalar_lea.sflag [#allocation6], %s348
        %s350 = sand.u32 %s53, 1
        %s351 = smul.addr %s350, 128
        %s352 = scalar_lea.vmem [#allocation5], %s351
        %p353 = pneg %p66
        %p354 = pneg %p63
        %s355 = sand.u32 %s24, 1
        %s356 = scalar_lea.sflag [#allocation6], %s355
        %s357 = sand.u32 %s79, 1
        %s358 = smul.addr %s357, 4
        %s359 = scalar_lea.vmem [#allocation7], %s358
        %p360 = pneg %p92
        %p361 = pneg %p89
        %p362 = scmp.lt.s32.totalorder %s24, 1
        %s363 = scalar_select %p362, %s24, 1
        %s364 = smul.addr %s363, 4
        %s365 = scalar_lea.vmem %s3, %s364
        %p366 = pneg %p118
        %p367 = pneg %p115
        %p368 = pneg %p139
        %p369 = pneg %p136
        %p370 = pneg %p160
        %p371 = pneg %p157
        %p372 = pneg %p181
        %p373 = pneg %p178
        %p374 = pneg %p202
        %p375 = pneg %p199
        %p376 = scmp.lt.s32.totalorder %s24, 1
        %s377 = scalar_select %p376, %s24, 1
        %s378 = smul.addr %s377, 4
        %s379 = scalar_lea.vmem %s3, %s378
        %p381 = scmp.eq.s32.totalorder %s24, 0
        // Predicated region
        $region69: #{tpu_custom_call.1} parent=47 // pred_check
          %p382 = pneg %p381
        $region70: #{tpu_custom_call.1} parent=47 // pred_check_branch
          %384 = sbr.rel (%p382) target = $region72
        $region71: #{tpu_custom_call.1} parent=47 // pred_region
          %v385 = vld [vmem:[#allocation2] sm:$0xff]
          %v386 = vld [vmem:[#allocation2 + $0x8] sm:$0xff]
          %387 = vst [vmem:[#allocation11] sm:$0xff] %v385
          %388 = vst [vmem:[#allocation11 + $0x8] sm:$0xff] %v386
        $region72: #{tpu_custom_call.1} parent=47 // pred_fallthru
          _
        %v389 = vld [vmem:[#allocation11] sm:$0xff]
        %v390 = vld [vmem:[#allocation11 + $0x8] sm:$0xff]
        %v391 = vld [vmem:[#allocation8] sm:$0xff]
        %v392 = vld [vmem:[#allocation8 + $0x8] sm:$0xff]
        %v393 = vld [vmem:[%s324] sm:$0xff]
        %v394 = vld [vmem:[%s324 + $0x8] sm:$0xff]
        %v395 = vld [vmem:[%s324 + $0x10] sm:$0xff]
        %v396 = vld [vmem:[%s324 + $0x18] sm:$0xff]
        %v397 = vld [vmem:[%s324 + $0x20] sm:$0xff]
        %v398 = vld [vmem:[%s324 + $0x28] sm:$0xff]
        %v399 = vld [vmem:[%s324 + $0x30] sm:$0xff]
        %v400 = vld [vmem:[%s324 + $0x38] sm:$0xff]
        %v401 = vld [vmem:[%s324 + $0x40] sm:$0xff]
        %v402 = vld [vmem:[%s324 + $0x48] sm:$0xff]
        %v403 = vld [vmem:[%s324 + $0x50] sm:$0xff]
        %v404 = vld [vmem:[%s324 + $0x58] sm:$0xff]
        %v405 = vld [vmem:[%s324 + $0x60] sm:$0xff]
        %v406 = vld [vmem:[%s324 + $0x68] sm:$0xff]
        %v407 = vld [vmem:[%s324 + $0x70] sm:$0xff]
        %v408 = vld [vmem:[%s324 + $0x78] sm:$0xff]
        %409 = vmatprep.subr.mxu0 0.0
        %410 = vmatpush1.msra.mxu0 %v393
        %411 = vmatprep.subr.mxu0 0.0
        %412 = vmatpush1.msra.mxu0 %v394
        %413 = vmatprep.subr.mxu0 0.0
        %414 = vmatpush1.msra.mxu0 %v395
        %415 = vmatprep.subr.mxu0 0.0
        %416 = vmatpush1.msra.mxu0 %v396
        %417 = vmatprep.subr.mxu0 0.0
        %418 = vmatpush1.msra.mxu0 %v397
        %419 = vmatprep.subr.mxu0 0.0
        %420 = vmatpush1.msra.mxu0 %v398
        %421 = vmatprep.subr.mxu0 0.0
        %422 = vmatpush1.msra.mxu0 %v399
        %423 = vmatprep.subr.mxu0 0.0
        %424 = vmatpush1.msra.mxu0 %v400
        %425 = vmatprep.subr.mxu0 0.0
        %426 = vmatpush1.msra.mxu0 %v401
        %427 = vmatprep.subr.mxu0 0.0
        %428 = vmatpush1.msra.mxu0 %v402
        %429 = vmatprep.subr.mxu0 0.0
        %430 = vmatpush1.msra.mxu0 %v403
        %431 = vmatprep.subr.mxu0 0.0
        %432 = vmatpush1.msra.mxu0 %v404
        %433 = vmatprep.subr.mxu0 0.0
        %434 = vmatpush1.msra.mxu0 %v405
        %435 = vmatprep.subr.mxu0 0.0
        %436 = vmatpush1.msra.mxu0 %v406
        %437 = vmatprep.subr.mxu0 0.0
        %438 = vmatpush1.msra.mxu0 %v407
        %439 = vmatprep.subr.mxu0 0.0
        %440 = vmatpush1.msra.mxu0 %v408
        %441 = vmatprep.subr.mxu0 0.0
        %442 = vmatpush1.msra.mxu0 0.0
        %443 = vmatprep.subr.mxu0 0.0
        %444 = vmatpush1.msra.mxu0 0.0
        %445 = vmatprep.subr.mxu0 0.0
        %446 = vmatpush1.msra.mxu0 0.0
        %447 = vmatprep.subr.mxu0 0.0
        %448 = vmatpush1.msra.mxu0 0.0
        %449 = vmatprep.subr.mxu0 0.0
        %450 = vmatpush1.msra.mxu0 0.0
        %451 = vmatprep.subr.mxu0 0.0
        %452 = vmatpush1.msra.mxu0 0.0
        %453 = vmatprep.subr.mxu0 0.0
        %454 = vmatpush1.msra.mxu0 0.0
        %455 = vmatprep.subr.mxu0 0.0
        %456 = vmatpush1.msra.mxu0 0.0
        %457 = vmatprep.subr.mxu0 0.0
        %458 = vmatpush1.msra.mxu0 0.0
        %459 = vmatprep.subr.mxu0 0.0
        %460 = vmatpush1.msra.mxu0 0.0
        %461 = vmatprep.subr.mxu0 0.0
        %462 = vmatpush1.msra.mxu0 0.0
        %463 = vmatprep.subr.mxu0 0.0
        %464 = vmatpush1.msra.mxu0 0.0
        %465 = vmatprep.subr.mxu0 0.0
        %466 = vmatpush1.msra.mxu0 0.0
        %467 = vmatprep.subr.mxu0 0.0
        %468 = vmatpush1.msra.mxu0 0.0
        %469 = vmatprep.subr.mxu0 0.0
        %470 = vmatpush1.msra.mxu0 0.0
        %471 = vmatprep.subr.mxu0 0.0
        %472 = vmatpush1.msra.mxu0 0.0
        %473 = vmatprep.mubr.f32.mxu0 0.0
        %474 = vmatmul.mubr.f32.gmra.mrb[0].mxu0 %v389
        %v475 = vpop.f32.mrb[0].mxu0
        %v476 = vadd.f32 0.0, %v475
        %v477 = vpop.f32.mrb[0].mxu0
        %478 = vmatprep.mubr.f32.mxu0 0.0
        %479 = vmatmul.mubr.f32.gmra.mrb[0].mxu0 %v390
        %v480 = vpop.f32.mrb[0].mxu0
        %v481 = vadd.f32 0.0, %v480
        %v482 = vpop.f32.mrb[0].mxu0
        %483 = vdwg.mxu0
        %v484 = vld [vmem:[%s333] sm:$0xf]
        %485 = vmatprep.subr.mxu0 0.0
        %486 = vmatpush1.xpose.msra.mxu0 %v476
        %487 = vmatprep.subr.mxu0 0.0
        %488 = vmatpush1.xpose.msra.mxu0 %v481
        %489 = vmatprep.subr.mxu0 0.0
        %490 = vmatpush1.xpose.msra.mxu0 0.0
        %491 = vmatprep.subr.mxu0 0.0
        %492 = vmatpush1.xpose.msra.mxu0 0.0
        %493 = vmatprep.subr.mxu0 0.0
        %494 = vmatpush1.xpose.msra.mxu0 0.0
        %495 = vmatprep.subr.mxu0 0.0
        %496 = vmatpush1.xpose.msra.mxu0 0.0
        %497 = vmatprep.subr.mxu0 0.0
        %498 = vmatpush1.xpose.msra.mxu0 0.0
        %499 = vmatprep.subr.mxu0 0.0
        %500 = vmatpush1.xpose.msra.mxu0 0.0
        %501 = vmatprep.subr.mxu0 0.0
        %502 = vmatpush1.xpose.msra.mxu0 0.0
        %503 = vmatprep.subr.mxu0 0.0
        %504 = vmatpush1.xpose.msra.mxu0 0.0
        %505 = vmatprep.subr.mxu0 0.0
        %506 = vmatpush1.xpose.msra.mxu0 0.0
        %507 = vmatprep.subr.mxu0 0.0
        %508 = vmatpush1.xpose.msra.mxu0 0.0
        %509 = vmatprep.subr.mxu0 0.0
        %510 = vmatpush1.xpose.msra.mxu0 0.0
        %511 = vmatprep.subr.mxu0 0.0
        %512 = vmatpush1.xpose.msra.mxu0 0.0
        %513 = vmatprep.subr.mxu0 0.0
        %514 = vmatpush1.xpose.msra.mxu0 0.0
        %515 = vmatprep.subr.mxu0 0.0
        %516 = vmatpush1.xpose.msra.mxu0 0.0
        %517 = vmatprep.subr.mxu0 0.0
        %518 = vmatpush1.xpose.msra.mxu0 0.0
        %519 = vmatprep.subr.mxu0 0.0
        %520 = vmatpush1.xpose.msra.mxu0 0.0
        %521 = vmatprep.subr.mxu0 0.0
        %522 = vmatpush1.xpose.msra.mxu0 0.0
        %523 = vmatprep.subr.mxu0 0.0
        %524 = vmatpush1.xpose.msra.mxu0 0.0
        %525 = vmatprep.subr.mxu0 0.0
        %526 = vmatpush1.xpose.msra.mxu0 0.0
        %527 = vmatprep.subr.mxu0 0.0
        %528 = vmatpush1.xpose.msra.mxu0 0.0
        %529 = vmatprep.subr.mxu0 0.0
        %530 = vmatpush1.xpose.msra.mxu0 0.0
        %531 = vmatprep.subr.mxu0 0.0
        %532 = vmatpush1.xpose.msra.mxu0 0.0
        %533 = vmatprep.subr.mxu0 0.0
        %534 = vmatpush1.xpose.msra.mxu0 0.0
        %535 = vmatprep.subr.mxu0 0.0
        %536 = vmatpush1.xpose.msra.mxu0 0.0
        %537 = vmatprep.subr.mxu0 0.0
        %538 = vmatpush1.xpose.msra.mxu0 0.0
        %539 = vmatprep.subr.mxu0 0.0
        %540 = vmatpush1.xpose.msra.mxu0 0.0
        %541 = vmatprep.subr.mxu0 0.0
        %542 = vmatpush1.xpose.msra.mxu0 0.0
        %543 = vmatprep.subr.mxu0 0.0
        %544 = vmatpush1.xpose.msra.mxu0 0.0
        %545 = vmatprep.subr.mxu0 0.0
        %546 = vmatpush1.xpose.msra.mxu0 0.0
        %547 = vmatprep.subr.mxu0 0.0
        %548 = vmatpush1.xpose.msra.mxu0 0.0
        %549 = vmatprep.mubr.f32.mxu0 0.0
        %550 = vmatmul.mubr.f32.gmra.mrb[0].mxu0 %v484
        %v551 = vpop.f32.mrb[0].mxu0
        %v552 = vadd.f32 0.0, %v551
        %v553 = vpop.f32.mrb[0].mxu0
        %554 = vdwg.mxu0
        %v555 = vld [vmem:[%s379] sm:$0xf]
        %556 = vmatprep.subr.mxu0 0.0
        %557 = vmatpush1.xpose.msra.mxu0 %v555
        %558 = vmatprep.subr.mxu0 0.0
        %559 = vmatpush1.xpose.msra.mxu0 0.0
        %560 = vmatprep.subr.mxu0 0.0
        %561 = vmatpush1.xpose.msra.mxu0 0.0
        %562 = vmatprep.subr.mxu0 0.0
        %563 = vmatpush1.xpose.msra.mxu0 0.0
        %564 = vmatprep.subr.mxu0 0.0
        %565 = vmatpush1.xpose.msra.mxu0 0.0
        %566 = vmatprep.subr.mxu0 0.0
        %567 = vmatpush1.xpose.msra.mxu0 0.0
        %568 = vmatprep.subr.mxu0 0.0
        %569 = vmatpush1.xpose.msra.mxu0 0.0
        %570 = vmatprep.subr.mxu0 0.0
        %571 = vmatpush1.xpose.msra.mxu0 0.0
        %572 = vmatprep.subr.mxu0 0.0
        %573 = vmatpush1.xpose.msra.mxu0 0.0
        %574 = vmatprep.subr.mxu0 0.0
        %575 = vmatpush1.xpose.msra.mxu0 0.0
        %576 = vmatprep.subr.mxu0 0.0
        %577 = vmatpush1.xpose.msra.mxu0 0.0
        %578 = vmatprep.subr.mxu0 0.0
        %579 = vmatpush1.xpose.msra.mxu0 0.0
        %580 = vmatprep.subr.mxu0 0.0
        %581 = vmatpush1.xpose.msra.mxu0 0.0
        %582 = vmatprep.subr.mxu0 0.0
        %583 = vmatpush1.xpose.msra.mxu0 0.0
        %584 = vmatprep.subr.mxu0 0.0
        %585 = vmatpush1.xpose.msra.mxu0 0.0
        %586 = vmatprep.subr.mxu0 0.0
        %587 = vmatpush1.xpose.msra.mxu0 0.0
        %588 = vmatprep.subr.mxu0 0.0
        %589 = vmatpush1.xpose.msra.mxu0 0.0
        %590 = vmatprep.subr.mxu0 0.0
        %591 = vmatpush1.xpose.msra.mxu0 0.0
        %592 = vmatprep.subr.mxu0 0.0
        %593 = vmatpush1.xpose.msra.mxu0 0.0
        %594 = vmatprep.subr.mxu0 0.0
        %595 = vmatpush1.xpose.msra.mxu0 0.0
        %596 = vmatprep.subr.mxu0 0.0
        %597 = vmatpush1.xpose.msra.mxu0 0.0
        %598 = vmatprep.subr.mxu0 0.0
        %599 = vmatpush1.xpose.msra.mxu0 0.0
        %600 = vmatprep.subr.mxu0 0.0
        %601 = vmatpush1.xpose.msra.mxu0 0.0
        %602 = vmatprep.subr.mxu0 0.0
        %603 = vmatpush1.xpose.msra.mxu0 0.0
        %604 = vmatprep.subr.mxu0 0.0
        %605 = vmatpush1.xpose.msra.mxu0 0.0
        %606 = vmatprep.subr.mxu0 0.0
        %607 = vmatpush1.xpose.msra.mxu0 0.0
        %608 = vmatprep.subr.mxu0 0.0
        %609 = vmatpush1.xpose.msra.mxu0 0.0
        %610 = vmatprep.subr.mxu0 0.0
        %611 = vmatpush1.xpose.msra.mxu0 0.0
        %612 = vmatprep.subr.mxu0 0.0
        %613 = vmatpush1.xpose.msra.mxu0 0.0
        %614 = vmatprep.subr.mxu0 0.0
        %615 = vmatpush1.xpose.msra.mxu0 0.0
        %616 = vmatprep.subr.mxu0 0.0
        %617 = vmatpush1.xpose.msra.mxu0 0.0
        %618 = vmatprep.subr.mxu0 0.0
        %619 = vmatpush1.xpose.msra.mxu0 0.0
        %620 = vmatprep.mubr.f32.mxu0 0.0
        %621 = vmatmul.mubr.f32.gmra.mrb[0].mxu0 %v476
        %v622 = vpop.f32.mrb[0].mxu0
        %v623 = vadd.f32 0.0, %v622
        %v624 = vpop.f32.mrb[0].mxu0
        %625 = vmatprep.mubr.f32.mxu0 0.0
        %626 = vmatmul.mubr.f32.gmra.mrb[0].mxu0 %v481
        %v627 = vpop.f32.mrb[0].mxu0
        %v628 = vadd.f32 0.0, %v627
        %v629 = vpop.f32.mrb[0].mxu0
        %630 = vdwg.mxu0
        %632 = vset.pattern.permute.xlu0 0
        %633 = vperm.xlu0 %632, %v623
        %v634 = vpop.permute.xlu0 %633
        %637 = vset.pattern.permute.xlu0 0
        %638 = vperm.xlu0 %637, %v628
        %v639 = vpop.permute.xlu0 %638
        %v641 = vlaneseq
        %v642 = vshrl.u32 %v641, 7
        %v643 = vsub.s32 0, %v642
        %v644 = vrot.slane %v552, %v643
        %v645 = vadd.f32 %v634, %v644
        %v646 = vadd.f32 %v639, %v644
        %v647 = vmul.f32 %v645, 0.01
        %v648 = vmul.f32 %v646, 0.01
        %v649 = vmax.f32 %v645, %v647
        %v650 = vmax.f32 %v646, %v648
        %v651 = vadd.f32 %v649, %v391
        %v652 = vadd.f32 %v650, %v392
        %vm653 = vcmask 130048
        %v654 = vsel %vm653, %v651, -inf
        %655 = vmax.xlane.f32.xlu0 %v654
        %v656 = vpop.xlane.xlu0 %655
        %v657 = vsel %vm653, %v652, -inf
        %658 = vmax.xlane.f32.xlu0 %v657
        %v659 = vpop.xlane.xlu0 %658
        %v660 = vsub.f32 %v651, %v656
        %v661 = vsub.f32 %v652, %v659
        %v662 = vmul.f32 %v660, 1.442695
        %v663 = vpow.pop %v662
        %v664 = vmul.f32 %v661, 1.442695
        %v665 = vpow.pop %v664
        %v666 = vsel %vm653, %v663, 0.0
        %667 = vadd.xlane.f32.xlu0 %v666
        %v668 = vpop.xlane.xlu0 %667
        %v669 = vsel %vm653, %v665, 0.0
        %670 = vadd.xlane.f32.xlu0 %v669
        %v671 = vpop.xlane.xlu0 %670
        %v672 = vmax.f32 %v668, 1e-30
        %v673 = vmax.f32 %v671, 1e-30
        %v674 = vrcp.pop %v672
        %v675 = vrcp.pop %v673
        %v676 = vld [vmem:[%s5] sm:$0x1]
        %v677 = vlaneseq
        %v678 = vshrl.u32 %v677, 7
        %v679 = vsub.s32 0, %v678
        %v680 = vrot.slane %v676, %v679
        %v681 = vmul.f32 %v476, %v680
        %v682 = vmul.f32 %v481, %v680
        %v683 = vpack.c.bf16 %v682, %v681
        %v684 = vpack.c.bf16 %v665, %v663
        %v686 = vsel %vm653, %v684, 0
        %688 = vmatprep.subr.bf16.mxu0 0
        %689 = vmatpush1.bf16.msra.mxu0 %v683
        %690 = vmatprep.subr.bf16.mxu0 0
        %691 = vmatpush1.bf16.msra.mxu0 0
        %692 = vmatprep.subr.bf16.mxu0 0
        %693 = vmatpush1.bf16.msra.mxu0 0
        %694 = vmatprep.subr.bf16.mxu0 0
        %695 = vmatpush1.bf16.msra.mxu0 0
        %696 = vmatprep.subr.bf16.mxu0 0
        %697 = vmatpush1.bf16.msra.mxu0 0
        %698 = vmatprep.subr.bf16.mxu0 0
        %699 = vmatpush1.bf16.msra.mxu0 0
        %700 = vmatprep.subr.bf16.mxu0 0
        %701 = vmatpush1.bf16.msra.mxu0 0
        %702 = vmatprep.subr.bf16.mxu0 0
        %703 = vmatpush1.bf16.msra.mxu0 0
        %704 = vmatprep.subr.bf16.mxu0 0
        %705 = vmatpush1.bf16.msra.mxu0 0
        %706 = vmatprep.subr.bf16.mxu0 0
        %707 = vmatpush1.bf16.msra.mxu0 0
        %708 = vmatprep.subr.bf16.mxu0 0
        %709 = vmatpush1.bf16.msra.mxu0 0
        %710 = vmatprep.subr.bf16.mxu0 0
        %711 = vmatpush1.bf16.msra.mxu0 0
        %712 = vmatprep.subr.bf16.mxu0 0
        %713 = vmatpush1.bf16.msra.mxu0 0
        %714 = vmatprep.subr.bf16.mxu0 0
        %715 = vmatpush1.bf16.msra.mxu0 0
        %716 = vmatprep.subr.bf16.mxu0 0
        %717 = vmatpush1.bf16.msra.mxu0 0
        %718 = vmatprep.subr.bf16.mxu0 0
        %719 = vmatpush1.bf16.msra.mxu0 0
        %720 = vmatprep.mubr.bf16.mxu0 0
        %721 = vmatmul.mubr.bf16.gmra.mrb[0].mxu0 %v686
        %v722 = vpop.f32.mrb[0].mxu0
        %v723 = vadd.f32 0.0, %v722
        %v724 = vpop.f32.mrb[0].mxu0
        %v725 = vpop.f32.mrb[0].mxu0
        %v726 = vadd.f32 0.0, %v725
        %v727 = vpop.f32.mrb[0].mxu0
        %728 = vdwg.mxu0
        %v729 = vmul.f32 %v723, %v674
        %v730 = vmul.f32 %v726, %v675
        %v731 = vadd.f32 %v729, 0.0
        %v732 = vadd.f32 %v730, 0.0
        %733 = vset.pattern.permute.xlu0 1
        %734 = vperm.xlu0 %733, %v623
        %v735 = vpop.permute.xlu0 %734
        %737 = vset.pattern.permute.xlu0 1
        %738 = vperm.xlu0 %737, %v628
        %v739 = vpop.permute.xlu0 %738
        %v741 = vlaneseq
        %v742 = vshrl.u32 %v741, 7
        %v743 = vsub.s32 1, %v742
        %v744 = vrot.slane %v552, %v743
        %v745 = vadd.f32 %v735, %v744
        %v746 = vadd.f32 %v739, %v744
        %v747 = vmul.f32 %v745, 0.01
        %v748 = vmul.f32 %v746, 0.01
        %v749 = vmax.f32 %v745, %v747
        %v750 = vmax.f32 %v746, %v748
        %v751 = vadd.f32 %v749, %v391
        %v752 = vadd.f32 %v750, %v392
        %v753 = vsel %vm653, %v751, -inf
        %754 = vmax.xlane.f32.xlu0 %v753
        %v755 = vpop.xlane.xlu0 %754
        %v756 = vsel %vm653, %v752, -inf
        %757 = vmax.xlane.f32.xlu0 %v756
        %v758 = vpop.xlane.xlu0 %757
        %v759 = vsub.f32 %v751, %v755
        %v760 = vsub.f32 %v752, %v758
        %v761 = vmul.f32 %v759, 1.442695
        %v762 = vpow.pop %v761
        %v763 = vmul.f32 %v760, 1.442695
        %v764 = vpow.pop %v763
        %v765 = vsel %vm653, %v762, 0.0
        %766 = vadd.xlane.f32.xlu0 %v765
        %v767 = vpop.xlane.xlu0 %766
        %v768 = vsel %vm653, %v764, 0.0
        %769 = vadd.xlane.f32.xlu0 %v768
        %v770 = vpop.xlane.xlu0 %769
        %v771 = vmax.f32 %v767, 1e-30
        %v772 = vmax.f32 %v770, 1e-30
        %v773 = vrcp.pop %v771
        %v774 = vrcp.pop %v772
        %v775 = vld [vmem:[%s5 + $0x1] sm:$0x1]
        %v776 = vlaneseq
        %v777 = vshrl.u32 %v776, 7
        %v778 = vsub.s32 0, %v777
        %v779 = vrot.slane %v775, %v778
        %v780 = vmul.f32 %v476, %v779
        %v781 = vmul.f32 %v481, %v779
        %v782 = vpack.c.bf16 %v781, %v780
        %v783 = vpack.c.bf16 %v764, %v762
        %v785 = vsel %vm653, %v783, 0
        %787 = vmatprep.subr.bf16.mxu0 0
        %788 = vmatpush1.bf16.msra.mxu0 %v782
        %789 = vmatprep.subr.bf16.mxu0 0
        %790 = vmatpush1.bf16.msra.mxu0 0
        %791 = vmatprep.subr.bf16.mxu0 0
        %792 = vmatpush1.bf16.msra.mxu0 0
        %793 = vmatprep.subr.bf16.mxu0 0
        %794 = vmatpush1.bf16.msra.mxu0 0
        %795 = vmatprep.subr.bf16.mxu0 0
        %796 = vmatpush1.bf16.msra.mxu0 0
        %797 = vmatprep.subr.bf16.mxu0 0
        %798 = vmatpush1.bf16.msra.mxu0 0
        %799 = vmatprep.subr.bf16.mxu0 0
        %800 = vmatpush1.bf16.msra.mxu0 0
        %801 = vmatprep.subr.bf16.mxu0 0
        %802 = vmatpush1.bf16.msra.mxu0 0
        %803 = vmatprep.subr.bf16.mxu0 0
        %804 = vmatpush1.bf16.msra.mxu0 0
        %805 = vmatprep.subr.bf16.mxu0 0
        %806 = vmatpush1.bf16.msra.mxu0 0
        %807 = vmatprep.subr.bf16.mxu0 0
        %808 = vmatpush1.bf16.msra.mxu0 0
        %809 = vmatprep.subr.bf16.mxu0 0
        %810 = vmatpush1.bf16.msra.mxu0 0
        %811 = vmatprep.subr.bf16.mxu0 0
        %812 = vmatpush1.bf16.msra.mxu0 0
        %813 = vmatprep.subr.bf16.mxu0 0
        %814 = vmatpush1.bf16.msra.mxu0 0
        %815 = vmatprep.subr.bf16.mxu0 0
        %816 = vmatpush1.bf16.msra.mxu0 0
        %817 = vmatprep.subr.bf16.mxu0 0
        %818 = vmatpush1.bf16.msra.mxu0 0
        %819 = vmatprep.mubr.bf16.mxu0 0
        %820 = vmatmul.mubr.bf16.gmra.mrb[0].mxu0 %v785
        %v821 = vpop.f32.mrb[0].mxu0
        %v822 = vadd.f32 0.0, %v821
        %v823 = vpop.f32.mrb[0].mxu0
        %v824 = vpop.f32.mrb[0].mxu0
        %v825 = vadd.f32 0.0, %v824
        %v826 = vpop.f32.mrb[0].mxu0
        %827 = vdwg.mxu0
        %v828 = vmul.f32 %v822, %v773
        %v829 = vmul.f32 %v825, %v774
        %v830 = vadd.f32 %v731, %v828
        %v831 = vadd.f32 %v732, %v829
        %832 = vset.pattern.permute.xlu0 2
        %833 = vperm.xlu0 %832, %v623
        %v834 = vpop.permute.xlu0 %833
        %836 = vset.pattern.permute.xlu0 2
        %837 = vperm.xlu0 %836, %v628
        %v838 = vpop.permute.xlu0 %837
        %v840 = vlaneseq
        %v841 = vshrl.u32 %v840, 7
        %v842 = vsub.s32 2, %v841
        %v843 = vrot.slane %v552, %v842
        %v844 = vadd.f32 %v834, %v843
        %v845 = vadd.f32 %v838, %v843
        %v846 = vmul.f32 %v844, 0.01
        %v847 = vmul.f32 %v845, 0.01
        %v848 = vmax.f32 %v844, %v846
        %v849 = vmax.f32 %v845, %v847
        %v850 = vadd.f32 %v848, %v391
        %v851 = vadd.f32 %v849, %v392
        %v852 = vsel %vm653, %v850, -inf
        %853 = vmax.xlane.f32.xlu0 %v852
        %v854 = vpop.xlane.xlu0 %853
        %v855 = vsel %vm653, %v851, -inf
        %856 = vmax.xlane.f32.xlu0 %v855
        %v857 = vpop.xlane.xlu0 %856
        %v858 = vsub.f32 %v850, %v854
        %v859 = vsub.f32 %v851, %v857
        %v860 = vmul.f32 %v858, 1.442695
        %v861 = vpow.pop %v860
        %v862 = vmul.f32 %v859, 1.442695
        %v863 = vpow.pop %v862
        %v864 = vsel %vm653, %v861, 0.0
        %865 = vadd.xlane.f32.xlu0 %v864
        %v866 = vpop.xlane.xlu0 %865
        %v867 = vsel %vm653, %v863, 0.0
        %868 = vadd.xlane.f32.xlu0 %v867
        %v869 = vpop.xlane.xlu0 %868
        %v870 = vmax.f32 %v866, 1e-30
        %v871 = vmax.f32 %v869, 1e-30
        %v872 = vrcp.pop %v870
        %v873 = vrcp.pop %v871
        %v874 = vld [vmem:[%s5 + $0x2] sm:$0x1]
        %v875 = vlaneseq
        %v876 = vshrl.u32 %v875, 7
        %v877 = vsub.s32 0, %v876
        %v878 = vrot.slane %v874, %v877
        %v879 = vmul.f32 %v476, %v878
        %v880 = vmul.f32 %v481, %v878
        %v881 = vpack.c.bf16 %v880, %v879
        %v882 = vpack.c.bf16 %v863, %v861
        %v884 = vsel %vm653, %v882, 0
        %886 = vmatprep.subr.bf16.mxu0 0
        %887 = vmatpush1.bf16.msra.mxu0 %v881
        %888 = vmatprep.subr.bf16.mxu0 0
        %889 = vmatpush1.bf16.msra.mxu0 0
        %890 = vmatprep.subr.bf16.mxu0 0
        %891 = vmatpush1.bf16.msra.mxu0 0
        %892 = vmatprep.subr.bf16.mxu0 0
        %893 = vmatpush1.bf16.msra.mxu0 0
        %894 = vmatprep.subr.bf16.mxu0 0
        %895 = vmatpush1.bf16.msra.mxu0 0
        %896 = vmatprep.subr.bf16.mxu0 0
        %897 = vmatpush1.bf16.msra.mxu0 0
        %898 = vmatprep.subr.bf16.mxu0 0
        %899 = vmatpush1.bf16.msra.mxu0 0
        %900 = vmatprep.subr.bf16.mxu0 0
        %901 = vmatpush1.bf16.msra.mxu0 0
        %902 = vmatprep.subr.bf16.mxu0 0
        %903 = vmatpush1.bf16.msra.mxu0 0
        %904 = vmatprep.subr.bf16.mxu0 0
        %905 = vmatpush1.bf16.msra.mxu0 0
        %906 = vmatprep.subr.bf16.mxu0 0
        %907 = vmatpush1.bf16.msra.mxu0 0
        %908 = vmatprep.subr.bf16.mxu0 0
        %909 = vmatpush1.bf16.msra.mxu0 0
        %910 = vmatprep.subr.bf16.mxu0 0
        %911 = vmatpush1.bf16.msra.mxu0 0
        %912 = vmatprep.subr.bf16.mxu0 0
        %913 = vmatpush1.bf16.msra.mxu0 0
        %914 = vmatprep.subr.bf16.mxu0 0
        %915 = vmatpush1.bf16.msra.mxu0 0
        %916 = vmatprep.subr.bf16.mxu0 0
        %917 = vmatpush1.bf16.msra.mxu0 0
        %918 = vmatprep.mubr.bf16.mxu0 0
        %919 = vmatmul.mubr.bf16.gmra.mrb[0].mxu0 %v884
        %v920 = vpop.f32.mrb[0].mxu0
        %v921 = vadd.f32 0.0, %v920
        %v922 = vpop.f32.mrb[0].mxu0
        %v923 = vpop.f32.mrb[0].mxu0
        %v924 = vadd.f32 0.0, %v923
        %v925 = vpop.f32.mrb[0].mxu0
        %926 = vdwg.mxu0
        %v927 = vmul.f32 %v921, %v872
        %v928 = vmul.f32 %v924, %v873
        %v929 = vadd.f32 %v830, %v927
        %v930 = vadd.f32 %v831, %v928
        %931 = vset.pattern.permute.xlu0 3
        %932 = vperm.xlu0 %931, %v623
        %v933 = vpop.permute.xlu0 %932
        %935 = vset.pattern.permute.xlu0 3
        %936 = vperm.xlu0 %935, %v628
        %v937 = vpop.permute.xlu0 %936
        %v939 = vlaneseq
        %v940 = vshrl.u32 %v939, 7
        %v941 = vsub.s32 3, %v940
        %v942 = vrot.slane %v552, %v941
        %v943 = vadd.f32 %v933, %v942
        %v944 = vadd.f32 %v937, %v942
        %v945 = vmul.f32 %v943, 0.01
        %v946 = vmul.f32 %v944, 0.01
        %v947 = vmax.f32 %v943, %v945
        %v948 = vmax.f32 %v944, %v946
        %v949 = vadd.f32 %v947, %v391
        %v950 = vadd.f32 %v948, %v392
        %v951 = vsel %vm653, %v949, -inf
        %952 = vmax.xlane.f32.xlu0 %v951
        %v953 = vpop.xlane.xlu0 %952
        %v954 = vsel %vm653, %v950, -inf
        %955 = vmax.xlane.f32.xlu0 %v954
        %v956 = vpop.xlane.xlu0 %955
        %v957 = vsub.f32 %v949, %v953
        %v958 = vsub.f32 %v950, %v956
        %v959 = vmul.f32 %v957, 1.442695
        %v960 = vpow.pop %v959
        %v961 = vmul.f32 %v958, 1.442695
        %v962 = vpow.pop %v961
        %v963 = vsel %vm653, %v960, 0.0
        %964 = vadd.xlane.f32.xlu0 %v963
        %v965 = vpop.xlane.xlu0 %964
        %v966 = vsel %vm653, %v962, 0.0
        %967 = vadd.xlane.f32.xlu0 %v966
        %v968 = vpop.xlane.xlu0 %967
        %v969 = vmax.f32 %v965, 1e-30
        %v970 = vmax.f32 %v968, 1e-30
        %v971 = vrcp.pop %v969
        %v972 = vrcp.pop %v970
        %v973 = vld [vmem:[%s5 + $0x3] sm:$0x1]
        %v974 = vlaneseq
        %v975 = vshrl.u32 %v974, 7
        %v976 = vsub.s32 0, %v975
        %v977 = vrot.slane %v973, %v976
        %v978 = vmul.f32 %v476, %v977
        %v979 = vmul.f32 %v481, %v977
        %v980 = vpack.c.bf16 %v979, %v978
        %v981 = vpack.c.bf16 %v962, %v960
        %v983 = vsel %vm653, %v981, 0
        %985 = vmatprep.subr.bf16.mxu0 0
        %986 = vmatpush1.bf16.msra.mxu0 %v980
        %987 = vmatprep.subr.bf16.mxu0 0
        %988 = vmatpush1.bf16.msra.mxu0 0
        %989 = vmatprep.subr.bf16.mxu0 0
        %990 = vmatpush1.bf16.msra.mxu0 0
        %991 = vmatprep.subr.bf16.mxu0 0
        %992 = vmatpush1.bf16.msra.mxu0 0
        %993 = vmatprep.subr.bf16.mxu0 0
        %994 = vmatpush1.bf16.msra.mxu0 0
        %995 = vmatprep.subr.bf16.mxu0 0
        %996 = vmatpush1.bf16.msra.mxu0 0
        %997 = vmatprep.subr.bf16.mxu0 0
        %998 = vmatpush1.bf16.msra.mxu0 0
        %999 = vmatprep.subr.bf16.mxu0 0
        %1000 = vmatpush1.bf16.msra.mxu0 0
        %1001 = vmatprep.subr.bf16.mxu0 0
        %1002 = vmatpush1.bf16.msra.mxu0 0
        %1003 = vmatprep.subr.bf16.mxu0 0
        %1004 = vmatpush1.bf16.msra.mxu0 0
        %1005 = vmatprep.subr.bf16.mxu0 0
        %1006 = vmatpush1.bf16.msra.mxu0 0
        %1007 = vmatprep.subr.bf16.mxu0 0
        %1008 = vmatpush1.bf16.msra.mxu0 0
        %1009 = vmatprep.subr.bf16.mxu0 0
        %1010 = vmatpush1.bf16.msra.mxu0 0
        %1011 = vmatprep.subr.bf16.mxu0 0
        %1012 = vmatpush1.bf16.msra.mxu0 0
        %1013 = vmatprep.subr.bf16.mxu0 0
        %1014 = vmatpush1.bf16.msra.mxu0 0
        %1015 = vmatprep.subr.bf16.mxu0 0
        %1016 = vmatpush1.bf16.msra.mxu0 0
        %1017 = vmatprep.mubr.bf16.mxu0 0
        %1018 = vmatmul.mubr.bf16.gmra.mrb[0].mxu0 %v983
        %v1019 = vpop.f32.mrb[0].mxu0
        %v1020 = vadd.f32 0.0, %v1019
        %v1021 = vpop.f32.mrb[0].mxu0
        %v1022 = vpop.f32.mrb[0].mxu0
        %v1023 = vadd.f32 0.0, %v1022
        %v1024 = vpop.f32.mrb[0].mxu0
        %1025 = vdwg.mxu0
        %v1026 = vmul.f32 %v1020, %v971
        %v1027 = vmul.f32 %v1023, %v972
        %v1028 = vadd.f32 %v929, %v1026
        %v1029 = vadd.f32 %v930, %v1027
        %vm1030 = vcmp.gt.f32.partialorder %v1028, 0.0
        %vm1031 = vcmp.gt.f32.partialorder %v1029, 0.0
        %v1032 = vmin.f32 %v1028, 0.0
        %v1033 = vmin.f32 %v1029, 0.0
        %v1034 = vmul.f32 %v1032, 1.442695
        %v1035 = vpow.pop %v1034
        %v1036 = vmul.f32 %v1033, 1.442695
        %v1037 = vpow.pop %v1036
        %v1038 = vsub.f32 %v1035, 1.0
        %v1039 = vsub.f32 %v1037, 1.0
        %v1040 = vsel %vm1030, %v1028, %v1038
        %v1041 = vsel %vm1031, %v1029, %v1039
        %v1042 = vld [vmem:[#allocation10] sm:$0xff]
        %v1043 = vld [vmem:[#allocation10 + $0x8] sm:$0xff]
        %v1044 = vld [vmem:[#allocation10 + $0x10] sm:$0xff]
        %v1045 = vld [vmem:[#allocation10 + $0x18] sm:$0xff]
        %v1046 = vld [vmem:[#allocation10 + $0x20] sm:$0xff]
        %v1047 = vld [vmem:[#allocation10 + $0x28] sm:$0xff]
        %v1048 = vld [vmem:[#allocation10 + $0x30] sm:$0xff]
        %v1049 = vld [vmem:[#allocation10 + $0x38] sm:$0xff]
        %v1050 = vld [vmem:[#allocation10 + $0x40] sm:$0xff]
        %v1051 = vld [vmem:[#allocation10 + $0x48] sm:$0xff]
        %v1052 = vld [vmem:[#allocation10 + $0x50] sm:$0xff]
        %v1053 = vld [vmem:[#allocation10 + $0x58] sm:$0xff]
        %v1054 = vld [vmem:[#allocation10 + $0x60] sm:$0xff]
        %v1055 = vld [vmem:[#allocation10 + $0x68] sm:$0xff]
        %v1056 = vld [vmem:[#allocation10 + $0x70] sm:$0xff]
        %v1057 = vld [vmem:[#allocation10 + $0x78] sm:$0xff]
        %v1058 = vmul.f32 %v389, 0.5
        %v1059 = vmul.f32 %v390, 0.5
        %1060 = vmatprep.subr.mxu0 0.0
        %1061 = vmatpush1.msra.mxu0 %v1042
        %1062 = vmatprep.subr.mxu0 0.0
        %1063 = vmatpush1.msra.mxu0 %v1043
        %1064 = vmatprep.subr.mxu0 0.0
        %1065 = vmatpush1.msra.mxu0 %v1044
        %1066 = vmatprep.subr.mxu0 0.0
        %1067 = vmatpush1.msra.mxu0 %v1045
        %1068 = vmatprep.subr.mxu0 0.0
        %1069 = vmatpush1.msra.mxu0 %v1046
        %1070 = vmatprep.subr.mxu0 0.0
        %1071 = vmatpush1.msra.mxu0 %v1047
        %1072 = vmatprep.subr.mxu0 0.0
        %1073 = vmatpush1.msra.mxu0 %v1048
        %1074 = vmatprep.subr.mxu0 0.0
        %1075 = vmatpush1.msra.mxu0 %v1049
        %1076 = vmatprep.subr.mxu0 0.0
        %1077 = vmatpush1.msra.mxu0 %v1050
        %1078 = vmatprep.subr.mxu0 0.0
        %1079 = vmatpush1.msra.mxu0 %v1051
        %1080 = vmatprep.subr.mxu0 0.0
        %1081 = vmatpush1.msra.mxu0 %v1052
        %1082 = vmatprep.subr.mxu0 0.0
        %1083 = vmatpush1.msra.mxu0 %v1053
        %1084 = vmatprep.subr.mxu0 0.0
        %1085 = vmatpush1.msra.mxu0 %v1054
        %1086 = vmatprep.subr.mxu0 0.0
        %1087 = vmatpush1.msra.mxu0 %v1055
        %1088 = vmatprep.subr.mxu0 0.0
        %1089 = vmatpush1.msra.mxu0 %v1056
        %1090 = vmatprep.subr.mxu0 0.0
        %1091 = vmatpush1.msra.mxu0 %v1057
        %1092 = vmatprep.subr.mxu0 0.0
        %1093 = vmatpush1.msra.mxu0 0.0
        %1094 = vmatprep.subr.mxu0 0.0
        %1095 = vmatpush1.msra.mxu0 0.0
        %1096 = vmatprep.subr.mxu0 0.0
        %1097 = vmatpush1.msra.mxu0 0.0
        %1098 = vmatprep.subr.mxu0 0.0
        %1099 = vmatpush1.msra.mxu0 0.0
        %1100 = vmatprep.subr.mxu0 0.0
        %1101 = vmatpush1.msra.mxu0 0.0
        %1102 = vmatprep.subr.mxu0 0.0
        %1103 = vmatpush1.msra.mxu0 0.0
        %1104 = vmatprep.subr.mxu0 0.0
        %1105 = vmatpush1.msra.mxu0 0.0
        %1106 = vmatprep.subr.mxu0 0.0
        %1107 = vmatpush1.msra.mxu0 0.0
        %1108 = vmatprep.subr.mxu0 0.0
        %1109 = vmatpush1.msra.mxu0 0.0
        %1110 = vmatprep.subr.mxu0 0.0
        %1111 = vmatpush1.msra.mxu0 0.0
        %1112 = vmatprep.subr.mxu0 0.0
        %1113 = vmatpush1.msra.mxu0 0.0
        %1114 = vmatprep.subr.mxu0 0.0
        %1115 = vmatpush1.msra.mxu0 0.0
        %1116 = vmatprep.subr.mxu0 0.0
        %1117 = vmatpush1.msra.mxu0 0.0
        %1118 = vmatprep.subr.mxu0 0.0
        %1119 = vmatpush1.msra.mxu0 0.0
        %1120 = vmatprep.subr.mxu0 0.0
        %1121 = vmatpush1.msra.mxu0 0.0
        %1122 = vmatprep.subr.mxu0 0.0
        %1123 = vmatpush1.msra.mxu0 0.0
        %1124 = vmatprep.mubr.f32.mxu0 0.0
        %1125 = vmatmul.mubr.f32.gmra.mrb[0].mxu0 %v1040
        %v1126 = vpop.f32.mrb[0].mxu0
        %v1127 = vadd.f32 %v1058, %v1126
        %v1128 = vpop.f32.mrb[0].mxu0
        %1129 = vmatprep.mubr.f32.mxu0 0.0
        %1130 = vmatmul.mubr.f32.gmra.mrb[0].mxu0 %v1041
        %v1131 = vpop.f32.mrb[0].mxu0
        %v1132 = vadd.f32 %v1059, %v1131
        %v1133 = vpop.f32.mrb[0].mxu0
        %1134 = vdwg.mxu0
        %v1135 = vmul.f32 %v1127, 0.01
        %v1136 = vmul.f32 %v1132, 0.01
        %v1137 = vmax.f32 %v1127, %v1135
        %v1138 = vmax.f32 %v1132, %v1136
        %1139 = vst [vmem:[#allocation11] sm:$0xff] %v1137
        %1140 = vst [vmem:[#allocation11 + $0x8] sm:$0xff] %v1138
        // Predicated region
        $region73: #{tpu_custom_call.1} parent=47 // pred_check
          %p1141 = pneg %p199
        $region74: #{tpu_custom_call.1} parent=47 // pred_check_branch
          %1143 = sbr.rel (%p1141) target = $region76
        $region75: #{tpu_custom_call.1} parent=47 // pred_region
          %s1145 = ssub.s32 256, 256
          %1146 = vsyncadd [#allocation4], %s1145
          %s1147 = sshll.u32 [#allocation11], 4
          %s1148 = int_to_ptr.vmem [resolvable:$true] %s1147
          %1153 = dma.vmem_to_hbm [thread:$0]  %s1148, 256, %s7, [#allocation4], 128, 128, 8
        $region76: #{tpu_custom_call.1} parent=47 // pred_fallthru
          _
        // Predicated region
        $region77: #{tpu_custom_call.1} parent=47 // pred_check
          %p1154 = pneg %p199
        $region78: #{tpu_custom_call.1} parent=47 // pred_check_branch
          %1156 = sbr.rel (%p1154) target = $region80
        $region79: #{tpu_custom_call.1} parent=47 // pred_region
          %1157 = dma.done [#allocation4], 256
        $region80: #{tpu_custom_call.1} parent=47 // pred_fallthru
          _
      $region48: #{tpu_custom_call.1} parent=5 // pred_fallthru
        _
      %p1158 = scmp.le.s32.totalorder 2, %s19
      // Predicated region
      $region81: #{tpu_custom_call.1} parent=5 // pred_check
        %p1159 = pneg %p1158
      $region82: #{tpu_custom_call.1} parent=5 // pred_check_branch
        %1161 = sbr.rel (%p1159) target = $region84
      $region83: #{tpu_custom_call.1} parent=5 // pred_region
        %s1162 = ssub.s32 %s19, 2
      $region84: #{tpu_custom_call.1} parent=5 // pred_fallthru
        _
    $region6: #{tpu_custom_call.1} parent=1 // loop_footer
      %s23 = sadd.s32 1, %s19
    $region7: #{tpu_custom_call.1} parent=1 // loop_footer_branch
      %18 = sbr.rel target = $region3
    $region8: #{tpu_custom_call.1} parent=1 // loop_exit
      _
    %1163 = vsyncpa [#allocation3], 1
    %s1164 = scalar_lea.sflag [#allocation3], 1
    %1165 = vsyncpa %s1164, 1
    %1166 = vsyncpa [#allocation6], 1
    %s1167 = scalar_lea.sflag [#allocation6], 1
    %1168 = vsyncpa %s1167, 1
    %1169 = vsyncpa [#allocation9], 1
    %1170 = vsyncpa [#allocation4], 1
    %s1171 = scalar_lea.sflag [#allocation4], 1
    %1172 = vsyncpa %s1171, 1

</llo_original>
